<compile_context>
chip_gen: v6e
topology: v6e:2x2x1
jax: 0.10.0
libtpu: 0.0.40
codegen_flags: <defaults>
</compile_context>

<pallas_src>
import numpy as np
import jax
import jax.numpy as jnp
from jax.experimental import pallas as pl
from jax.experimental.pallas import tpu as pltpu


# ----------------------------------------------------------------------------
# Deterministic parameter init (same recipe as the PyTorch __init__).
# ----------------------------------------------------------------------------
def make_brief_positions(desc_size=512, patch_size=32, seed=1):
    random = np.random.RandomState()
    random.seed(seed)
    samples = patch_size / 5.0 * random.randn(desc_size * 8)
    samples = np.array(samples, dtype=np.int32)
    samples = samples[(samples <= patch_size // 2) &
                      (samples >= -(patch_size - 2) // 2)]
    samples += patch_size // 2 - 1
    pos1 = samples[:desc_size * 2].reshape(desc_size, 2)
    pos2 = samples[desc_size * 2:desc_size * 4].reshape(desc_size, 2)
    return pos1.astype(np.int64), pos2.astype(np.int64)


def make_sel_diff(pos1, pos2, patch_size, desc_size):
    """Signed selection matrix (P*P, D), entries in {-1, 0, +1}, such that
    (x_flat @ sel_diff)[:, d] == x[pos1[d]] - x[pos2[d]] (exactly, in f32)."""
    f1 = pos1[:, 0] * patch_size + pos1[:, 1]          # (D,)
    f2 = pos2[:, 0] * patch_size + pos2[:, 1]          # (D,)
    cols = np.arange(desc_size)
    sel = np.zeros((patch_size * patch_size, desc_size), dtype=np.float32)
    np.add.at(sel, (f1, cols), 1.0)
    np.add.at(sel, (f2, cols), -1.0)                   # pos1==pos2 -> 0 -> False, matches a < a
    return sel.astype(np.float32)                      # values exact in bf16 too


# ----------------------------------------------------------------------------
# Pallas kernel: one MXU matmul (fused signed gather) + VPU sign compare.
# ----------------------------------------------------------------------------
def brief_kernel(x_ref, seld_ref, out_ref):
    x = x_ref[...]                                     # (TILE_N, P*P) f32
    sel = seld_ref[...].astype(jnp.float32)            # bf16 -> f32 (exact: 0/±1)
    diff = jnp.dot(x, sel, preferred_element_type=jnp.float32)   # (TILE_N, D)
    out_ref[...] = (diff < 0.0).astype(jnp.int8)       # 1 where pv1 < pv2


def brief_descriptor(patches, sel_diff_bf16, *, tile_n=128):
    """patches: (N, 1, P, P) f32 (NCHW).  sel_diff_bf16: (P*P, D) bf16.
    Returns (N, D) bool."""
    N, _, P, _ = patches.shape
    HW = P * P
    D = sel_diff_bf16.shape[1]

    x = patches[:, 0, :, :].reshape(N, HW)             # flatten spatial dims

    n_tiles = pl.cdiv(N, tile_n)
    n_pad = n_tiles * tile_n
    if n_pad != N:
        x = jnp.pad(x, ((0, n_pad - N), (0, 0)))       # pad rows; garbage rows sliced off below

    out_i8 = pl.pallas_call(
        brief_kernel,
        out_shape=jax.ShapeDtypeStruct((n_pad, D), jnp.int8),
        grid=(n_tiles,),
        in_specs=[
            pl.BlockSpec((tile_n, HW), lambda i: (i, 0)),    # stream x tiles over N
            pl.BlockSpec((HW, D), lambda i: (0, 0)),         # sel_diff resident (constant block)
        ],
        out_specs=pl.BlockSpec((tile_n, D), lambda i: (i, 0)),
        compiler_params=pltpu.CompilerParams(
            dimension_semantics=("parallel",)),              # v7x: shard N over 2 TCs
    )(x, sel_diff_bf16)

    return out_i8[:N].astype(jnp.bool_)                # match torch bool dtype


if __name__ == "__main__":
    DESC_SIZE = 512
    PATCH_SIZE = 32
    N = 200                                            # exercises grid=(2,) + row padding

    # Deterministic BRIEF sampling pattern (module "parameters").
    pos1, pos2 = make_brief_positions(DESC_SIZE, PATCH_SIZE, seed=1)
    sel_diff = make_sel_diff(pos1, pos2, PATCH_SIZE, DESC_SIZE)
    sel_diff_bf16 = jnp.asarray(sel_diff, dtype=jnp.bfloat16)   # 0/±1 exact in bf16

    # Deterministic example input: (N, 1, 32, 32) f32, NCHW like the torch module.
    key = jax.random.PRNGKey(0)
    patches = jax.random.uniform(
        key, (N, 1, PATCH_SIZE, PATCH_SIZE), dtype=jnp.float32) * 255.0

    desc = brief_descriptor(patches, sel_diff_bf16)
    desc = jax.block_until_ready(desc)

    # Pure-JAX reference (exact gather + compare), for correctness.
    p1 = jnp.asarray(pos1)
    p2 = jnp.asarray(pos2)
    pv1_ref = patches[:, 0, p1[:, 0], p1[:, 1]]
    pv2_ref = patches[:, 0, p2[:, 0], p2[:, 1]]
    ref = pv1_ref < pv2_ref

    assert desc.shape == (N, DESC_SIZE)
    assert desc.dtype == jnp.bool_
    assert bool(jnp.all(desc == ref))

    print("KERNEL_OK")
</pallas_src>

<mosaic_0001>
module attributes {stable_mosaic.version = 11 : i64} {
  func.func @brief_kernel(%arg0: i32, %arg1: memref<128x1024xf32, #tpu.memory_space<vmem>>, %arg2: memref<1024x512xbf16, #tpu.memory_space<vmem>>, %arg3: memref<128x512xi8, #tpu.memory_space<vmem>>) attributes {dimension_semantics = [#tpu.dimension_semantics<parallel>], iteration_bounds = array<i64: 2>, scalar_prefetch = 0 : i64, scratch_operands = 0 : i64, tpu.core_type = #tpu.core_type<tc>, window_params = [{transform_indices = @transform_0, window_bounds = array<i64: 128, 1024>}, {pipeline_mode = #tpu.pipeline_mode<synchronous>, transform_indices = @transform_1, window_bounds = array<i64: 1024, 512>}, {transform_indices = @transform_2, window_bounds = array<i64: 128, 512>}]} {
    %c0 = arith.constant 0 : index
    %c0_0 = arith.constant 0 : index
    %0 = vector.load %arg1[%c0, %c0_0] : memref<128x1024xf32, #tpu.memory_space<vmem>>, vector<128x1024xf32>
    %c0_1 = arith.constant 0 : index
    %c0_2 = arith.constant 0 : index
    %1 = vector.load %arg2[%c0_1, %c0_2] : memref<1024x512xbf16, #tpu.memory_space<vmem>>, vector<1024x512xbf16>
    %2 = arith.extf %1 : vector<1024x512xbf16> to vector<1024x512xf32>
    %cst = arith.constant dense<0.000000e+00> : vector<128x512xf32>
    %3 = tpu.matmul %0, %2, %cst {dimension_numbers = #tpu.dot_dimension_numbers<[1], [0], [0], [1], [0, 0, 1, 1], [], []>} : vector<128x1024xf32>, vector<1024x512xf32>, vector<128x512xf32> -> vector<128x512xf32>
    %cst_3 = arith.constant 0.000000e+00 : f32
    %4 = vector.broadcast %cst_3 : f32 to vector<128x512xf32>
    %5 = arith.cmpf olt, %3, %4 : vector<128x512xf32>
    %6 = arith.extui %5 : vector<128x512xi1> to vector<128x512xi8>
    %c0_4 = arith.constant 0 : index
    %c0_5 = arith.constant 0 : index
    %7 = vector.load %arg3[%c0_4, %c0_5] : memref<128x512xi8, #tpu.memory_space<vmem>>, vector<128x512xi8>
    tpu.vector_store %arg3[%c0_4, %c0_5], %6 {strides = array<i32>} : memref<128x512xi8, #tpu.memory_space<vmem>>, vector<128x512xi8>,
    return
  }
  func.func @transform_0(%arg0: i32) -> (i32, i32) {
    %c0_i32 = arith.constant 0 : i32
    %c0_i32_0 = arith.constant 0 : i32
    return %arg0, %c0_i32 : i32, i32
  }
  func.func @transform_1(%arg0: i32) -> (i32, i32) {
    %c0_i32 = arith.constant 0 : i32
    %c0_i32_0 = arith.constant 0 : i32
    %c0_i32_1 = arith.constant 0 : i32
    return %c0_i32, %c0_i32_0 : i32, i32
  }
  func.func @transform_2(%arg0: i32) -> (i32, i32) {
    %c0_i32 = arith.constant 0 : i32
    %c0_i32_0 = arith.constant 0 : i32
    return %arg0, %c0_i32 : i32, i32
  }
}

</mosaic_0001>

<llo_original>
// kernel: tpu_custom_call.1
$region0: #{tpu_custom_call.1}
  #allocation0 [shape = 'u32[]', space=smem, size = 0x4, offset = 0x4, fixed_abs, tag = 'smem constant byte address 0x4 - core index']
  #allocation1 [shape = 'u32[144,128]{1,0:T(1,128)}', space=vmem, size = 0x12000, scoped, tag = 'internal scratch']
  %s0 = inlined_call_operand.hbm [shape: f32[256,1024], index: 0, kind: input, shape index: {}]
  %s1 = inlined_call_operand.hbm [shape: bf16[1024,512], index: 1, kind: input, shape index: {}]
  %s2 = inlined_call_operand.hbm [shape: s8[256,512], index: 2, kind: output, shape index: {}]
  %s3 = sld [smem:[#allocation0]]
  $region49: #{tpu_custom_call.1} parent=0
    _
  %s5 = ssub.s32 1, %s3
  %s6 = scalar_select 0, %s5, %s3
  $region1: #{tpu_custom_call.1} parent=0
    #allocation2 [shape = 'u8[1048576]{0}', space=vmem, size = 0x100000, scoped, tag = 'input window, operand 0']
    #allocation3 [shape = 's32[2]{0}', space=sflag, size = 0x8, scoped, tag = 'scoped memory for tpu_custom_call.1']
    #allocation4 [shape = 's32[2]{0}', space=sflag, size = 0x8, scoped, tag = 'scoped memory for tpu_custom_call.1']
    #allocation5 [shape = 'u8[1048576]{0}', space=vmem, size = 0x100000, scoped, tag = 'input window, operand 1, single buffered']
    #allocation6 [shape = 's32[1]{0}', space=sflag, size = 0x4, scoped, tag = 'scoped memory for tpu_custom_call.1']
    #allocation7 [shape = 'u8[131072]{0}', space=vmem, size = 0x20000, scoped, tag = 'output window, operand 0']
    %7 = vsyncpa [#allocation3], 0
    %s8 = scalar_lea.sflag [#allocation3], 1
    %9 = vsyncpa %s8, 0
    %10 = vsyncpa [#allocation6], 0
    %11 = vsyncpa [#allocation4], 0
    %s12 = scalar_lea.sflag [#allocation4], 1
    %13 = vsyncpa %s12, 0
    loop: start=0, step=1, limit=4
    $region2: #{tpu_custom_call.1} parent=1 // loop_pre_header
      _
    $region3: #{tpu_custom_call.1} parent=1 // loop_header
      %s15 = sphi 0, %s19
      %p16 = scmp.ge.s32.totalorder %s15, 4
      %s25 = sphi 0, %s27
      %s28 = sphi 0, %s25
      %s29 = sphi 0, %s28
      %s45 = sphi 0, %s29
      %s49 = sphi 0, %s49
      %s51 = sphi 0, %s49
      %s52 = sphi 0, %s51
      %s66 = sphi 0, %s52
      %s72 = sphi 0, %s74
      %s75 = sphi 0, %s72
      %s76 = sphi 0, %s75
      %s92 = sphi 0, %s76
    $region4: #{tpu_custom_call.1} parent=1 // loop_header_branch
      %18 = sbr.rel (%p16) target = $region8
    $region5: #{tpu_custom_call.1} parent=1 // loop_body
      %s20 = ssub.s32 %s15, 1
      %s21 = ssub.s32 %s15, 2
      %s22 = sadd.s32 %s15, 1
      %s23 = ssub.s32 %s15, %s22
      %p24 = scmp.eq.s32.totalorder %s23, 0
      %s26 = sadd.s32 %s25, 1
      %s27 = scalar_select %p24, %s25, %s26
      %p30 = pneg %p24
      %p31 = scmp.eq.s32.totalorder %s15, 1
      %p32 = por %p30, %p31
      %p33 = scmp.ne.s32.totalorder %s25, %s28
      %p34 = scmp.eq.s32.totalorder %s15, 0
      %p35 = por %p33, %p34
      %p36 = scmp.ne.s32.totalorder %s25, %s28
      %p37 = scmp.eq.s32.totalorder %s20, 1
      %p38 = por %p36, %p37
      %p39 = scmp.ne.s32.totalorder %s28, %s29
      %p40 = scmp.eq.s32.totalorder %s20, 0
      %p41 = por %p39, %p40
      %p42 = scmp.ne.s32.totalorder %s28, %s29
      %p43 = scmp.eq.s32.totalorder %s21, 1
      %p44 = por %p42, %p43
      %p46 = scmp.ne.s32.totalorder %s29, %s45
      %p47 = scmp.eq.s32.totalorder %s21, 0
      %p48 = por %p46, %p47
      %s50 = sadd.s32 %s49, 1
      %p53 = scmp.eq.s32.totalorder %s15, 1
      %p54 = scmp.ne.s32.totalorder %s49, %s51
      %p55 = scmp.eq.s32.totalorder %s15, 0
      %p56 = por %p54, %p55
      %p57 = scmp.ne.s32.totalorder %s49, %s51
      %p58 = scmp.eq.s32.totalorder %s20, 1
      %p59 = por %p57, %p58
      %p60 = scmp.ne.s32.totalorder %s51, %s52
      %p61 = scmp.eq.s32.totalorder %s20, 0
      %p62 = por %p60, %p61
      %p63 = scmp.ne.s32.totalorder %s51, %s52
      %p64 = scmp.eq.s32.totalorder %s21, 1
      %p65 = por %p63, %p64
      %p67 = scmp.ne.s32.totalorder %s52, %s66
      %p68 = scmp.eq.s32.totalorder %s21, 0
      %p69 = por %p67, %p68
      %s70 = ssub.s32 %s15, %s22
      %p71 = scmp.eq.s32.totalorder %s70, 0
      %s73 = sadd.s32 %s72, 1
      %s74 = scalar_select %p71, %s72, %s73
      %p77 = pneg %p71
      %p78 = scmp.eq.s32.totalorder %s15, 1
      %p79 = por %p77, %p78
      %p80 = scmp.ne.s32.totalorder %s72, %s75
      %p81 = scmp.eq.s32.totalorder %s15, 0
      %p82 = por %p80, %p81
      %p83 = scmp.ne.s32.totalorder %s72, %s75
      %p84 = scmp.eq.s32.totalorder %s20, 1
      %p85 = por %p83, %p84
      %p86 = scmp.ne.s32.totalorder %s75, %s76
      %p87 = scmp.eq.s32.totalorder %s20, 0
      %p88 = por %p86, %p87
      %p89 = scmp.ne.s32.totalorder %s75, %s76
      %p90 = scmp.eq.s32.totalorder %s21, 1
      %p91 = por %p89, %p90
      %p93 = scmp.ne.s32.totalorder %s76, %s92
      %p94 = scmp.eq.s32.totalorder %s21, 0
      %p95 = por %p93, %p94
      %p96 = scmp.le.s32.totalorder 1, %s15
      %p97 = scmp.lt.s32.totalorder %s15, 3
      %p98 = pnand %p96, %p97
      %p99 = pneg %p98
      // Predicated region
      $region9: #{tpu_custom_call.1} parent=5 // pred_check
        _
      $region10: #{tpu_custom_call.1} parent=5 // pred_check_branch
        %101 = sbr.rel (%p98) target = $region12
      $region11: #{tpu_custom_call.1} parent=5 // pred_region
        %s102 = ssub.s32 %s15, 1
        // Predicated region
        $region13: #{tpu_custom_call.1} parent=11 // pred_check
          %p103 = pneg %p62
        $region14: #{tpu_custom_call.1} parent=11 // pred_check_branch
          %105 = sbr.rel (%p103) target = $region16
        $region15: #{tpu_custom_call.1} parent=11 // pred_region
          %s107 = ssub.s32 32768, 32768
          %108 = vsyncadd [#allocation6], %s107
          %s109 = sshll.u32 [#allocation5], 4
          %s110 = int_to_ptr.vmem [resolvable:$true] %s109
          %115 = dma.hbm_to_vmem [thread:$0]  %s1, 32768, %s110, [#allocation6], 256, 256, 16
        $region16: #{tpu_custom_call.1} parent=11 // pred_fallthru
          _
      $region12: #{tpu_custom_call.1} parent=5 // pred_fallthru
        _
      %p116 = scmp.lt.s32.totalorder %s15, 2
      // Predicated region
      $region17: #{tpu_custom_call.1} parent=5 // pred_check
        %p117 = pneg %p116
      $region18: #{tpu_custom_call.1} parent=5 // pred_check_branch
        %119 = sbr.rel (%p117) target = $region20
      $region19: #{tpu_custom_call.1} parent=5 // pred_region
        // Predicated region
        $region21: #{tpu_custom_call.1} parent=19 // pred_check
          %p120 = pneg %p35
        $region22: #{tpu_custom_call.1} parent=19 // pred_check_branch
          %122 = sbr.rel (%p120) target = $region24
        $region23: #{tpu_custom_call.1} parent=19 // pred_region
          %s123 = sand.u32 %s25, 1
          %s124 = scalar_lea.sflag [#allocation3], %s123
          %s125 = sand.u32 %s25, 1
          %s126 = smul.addr %s125, 1024
          %s127 = scalar_lea.vmem [#allocation2], %s126
          %s128 = smul.u32 16, %s15
          %s130 = ssub.s32 16384, 16384
          %131 = vsyncadd %s124, %s130
          %s132 = smul.addr %s128, 8
          %s133 = smul.addr %s132, 128
          %s134 = scalar_lea.hbm %s0, %s133
          %s135 = sshll.u32 %s127, 4
          %s136 = int_to_ptr.vmem [resolvable:$true] %s135
          %141 = dma.hbm_to_vmem [thread:$0]  %s134, 16384, %s136, %s124, 1024, 1024, 64
        $region24: #{tpu_custom_call.1} parent=19 // pred_fallthru
          _
      $region20: #{tpu_custom_call.1} parent=5 // pred_fallthru
        _
      %p142 = scmp.le.s32.totalorder 1, %s15
      %p143 = scmp.lt.s32.totalorder %s15, 3
      %p144 = pnand %p142, %p143
      %p145 = pneg %p144
      // Predicated region
      $region25: #{tpu_custom_call.1} parent=5 // pred_check
        _
      $region26: #{tpu_custom_call.1} parent=5 // pred_check_branch
        %147 = sbr.rel (%p144) target = $region28
      $region27: #{tpu_custom_call.1} parent=5 // pred_region
        %s148 = ssub.s32 %s15, 1
        %s149 = sand.u32 %s28, 1
        %s150 = scalar_lea.sflag [#allocation3], %s149
        %s151 = sand.u32 %s28, 1
        %s152 = smul.addr %s151, 1024
        %s153 = scalar_lea.vmem [#allocation2], %s152
        // Predicated region
        $region29: #{tpu_custom_call.1} parent=27 // pred_check
          %p154 = pneg %p41
        $region30: #{tpu_custom_call.1} parent=27 // pred_check_branch
          %156 = sbr.rel (%p154) target = $region32
        $region31: #{tpu_custom_call.1} parent=27 // pred_region
          %157 = dma.done %s150, 16384
        $region32: #{tpu_custom_call.1} parent=27 // pred_fallthru
          _
        // Predicated region
        $region33: #{tpu_custom_call.1} parent=27 // pred_check
          %p158 = pneg %p62
        $region34: #{tpu_custom_call.1} parent=27 // pred_check_branch
          %160 = sbr.rel (%p158) target = $region36
        $region35: #{tpu_custom_call.1} parent=27 // pred_region
          %161 = dma.done [#allocation6], 32768
        $region36: #{tpu_custom_call.1} parent=27 // pred_fallthru
          _
        %s162 = sand.u32 %s28, 1
        %s163 = scalar_lea.sflag [#allocation3], %s162
        %s164 = sand.u32 %s28, 1
        %s165 = smul.addr %s164, 1024
        %s166 = scalar_lea.vmem [#allocation2], %s165
        %p167 = pneg %p41
        %p168 = pneg %p38
        %p169 = pneg %p62
        %p170 = pneg %p59
        %p171 = pneg %p88
        %p172 = pneg %p85
        %s173 = sand.u32 %s75, 1
        %s174 = scalar_lea.sflag [#allocation4], %s173
        %s175 = sand.u32 %s75, 1
        %s176 = smul.addr %s175, 128
        %s177 = scalar_lea.vmem [#allocation7], %s176
        %s178 = smul.u32 16, %s20
        %s179 = smul.u32 4, %s20
        %v182 = vld [vmem:[%s153] sm:$0xff]
        %v183 = vld [vmem:[%s153 + $0x8] sm:$0xff]
        %v184 = vld [vmem:[%s153 + $0x10] sm:$0xff]
        %v185 = vld [vmem:[%s153 + $0x18] sm:$0xff]
        %v186 = vld [vmem:[%s153 + $0x20] sm:$0xff]
        %v187 = vld [vmem:[%s153 + $0x28] sm:$0xff]
        %v188 = vld [vmem:[%s153 + $0x30] sm:$0xff]
        %v189 = vld [vmem:[%s153 + $0x38] sm:$0xff]
        %v190 = vld [vmem:[%s153 + $0x40] sm:$0xff]
        %v191 = vld [vmem:[%s153 + $0x48] sm:$0xff]
        %v192 = vld [vmem:[%s153 + $0x50] sm:$0xff]
        %v193 = vld [vmem:[%s153 + $0x58] sm:$0xff]
        %v194 = vld [vmem:[%s153 + $0x60] sm:$0xff]
        %v195 = vld [vmem:[%s153 + $0x68] sm:$0xff]
        %v196 = vld [vmem:[%s153 + $0x70] sm:$0xff]
        %v197 = vld [vmem:[%s153 + $0x78] sm:$0xff]
        %v198 = vld [vmem:[%s153 + $0x80] sm:$0xff]
        %v199 = vld [vmem:[%s153 + $0x88] sm:$0xff]
        %v200 = vld [vmem:[%s153 + $0x90] sm:$0xff]
        %v201 = vld [vmem:[%s153 + $0x98] sm:$0xff]
        %v202 = vld [vmem:[%s153 + $0xa0] sm:$0xff]
        %v203 = vld [vmem:[%s153 + $0xa8] sm:$0xff]
        %v204 = vld [vmem:[%s153 + $0xb0] sm:$0xff]
        %v205 = vld [vmem:[%s153 + $0xb8] sm:$0xff]
        %v206 = vld [vmem:[%s153 + $0xc0] sm:$0xff]
        %v207 = vld [vmem:[%s153 + $0xc8] sm:$0xff]
        %v208 = vld [vmem:[%s153 + $0xd0] sm:$0xff]
        %v209 = vld [vmem:[%s153 + $0xd8] sm:$0xff]
        %v210 = vld [vmem:[%s153 + $0xe0] sm:$0xff]
        %v211 = vld [vmem:[%s153 + $0xe8] sm:$0xff]
        %v212 = vld [vmem:[%s153 + $0xf0] sm:$0xff]
        %v213 = vld [vmem:[%s153 + $0xf8] sm:$0xff]
        %v214 = vld [vmem:[%s153 + $0x100] sm:$0xff]
        %v215 = vld [vmem:[%s153 + $0x108] sm:$0xff]
        %v216 = vld [vmem:[%s153 + $0x110] sm:$0xff]
        %v217 = vld [vmem:[%s153 + $0x118] sm:$0xff]
        %v218 = vld [vmem:[%s153 + $0x120] sm:$0xff]
        %v219 = vld [vmem:[%s153 + $0x128] sm:$0xff]
        %v220 = vld [vmem:[%s153 + $0x130] sm:$0xff]
        %v221 = vld [vmem:[%s153 + $0x138] sm:$0xff]
        %v222 = vld [vmem:[%s153 + $0x140] sm:$0xff]
        %v223 = vld [vmem:[%s153 + $0x148] sm:$0xff]
        %v224 = vld [vmem:[%s153 + $0x150] sm:$0xff]
        %v225 = vld [vmem:[%s153 + $0x158] sm:$0xff]
        %v226 = vld [vmem:[%s153 + $0x160] sm:$0xff]
        %v227 = vld [vmem:[%s153 + $0x168] sm:$0xff]
        %v228 = vld [vmem:[%s153 + $0x170] sm:$0xff]
        %v229 = vld [vmem:[%s153 + $0x178] sm:$0xff]
        %v230 = vld [vmem:[%s153 + $0x180] sm:$0xff]
        %v231 = vld [vmem:[%s153 + $0x188] sm:$0xff]
        %v232 = vld [vmem:[%s153 + $0x190] sm:$0xff]
        %v233 = vld [vmem:[%s153 + $0x198] sm:$0xff]
        %v234 = vld [vmem:[%s153 + $0x1a0] sm:$0xff]
        %v235 = vld [vmem:[%s153 + $0x1a8] sm:$0xff]
        %v236 = vld [vmem:[%s153 + $0x1b0] sm:$0xff]
        %v237 = vld [vmem:[%s153 + $0x1b8] sm:$0xff]
        %v238 = vld [vmem:[%s153 + $0x1c0] sm:$0xff]
        %v239 = vld [vmem:[%s153 + $0x1c8] sm:$0xff]
        %v240 = vld [vmem:[%s153 + $0x1d0] sm:$0xff]
        %v241 = vld [vmem:[%s153 + $0x1d8] sm:$0xff]
        %v242 = vld [vmem:[%s153 + $0x1e0] sm:$0xff]
        %v243 = vld [vmem:[%s153 + $0x1e8] sm:$0xff]
        %v244 = vld [vmem:[%s153 + $0x1f0] sm:$0xff]
        %v245 = vld [vmem:[%s153 + $0x1f8] sm:$0xff]
        %v246 = vld [vmem:[%s153 + $0x200] sm:$0xff]
        %v247 = vld [vmem:[%s153 + $0x208] sm:$0xff]
        %v248 = vld [vmem:[%s153 + $0x210] sm:$0xff]
        %v249 = vld [vmem:[%s153 + $0x218] sm:$0xff]
        %v250 = vld [vmem:[%s153 + $0x220] sm:$0xff]
        %v251 = vld [vmem:[%s153 + $0x228] sm:$0xff]
        %v252 = vld [vmem:[%s153 + $0x230] sm:$0xff]
        %v253 = vld [vmem:[%s153 + $0x238] sm:$0xff]
        %v254 = vld [vmem:[%s153 + $0x240] sm:$0xff]
        %v255 = vld [vmem:[%s153 + $0x248] sm:$0xff]
        %v256 = vld [vmem:[%s153 + $0x250] sm:$0xff]
        %v257 = vld [vmem:[%s153 + $0x258] sm:$0xff]
        %v258 = vld [vmem:[%s153 + $0x260] sm:$0xff]
        %v259 = vld [vmem:[%s153 + $0x268] sm:$0xff]
        %v260 = vld [vmem:[%s153 + $0x270] sm:$0xff]
        %v261 = vld [vmem:[%s153 + $0x278] sm:$0xff]
        %v262 = vld [vmem:[%s153 + $0x280] sm:$0xff]
        %v263 = vld [vmem:[%s153 + $0x288] sm:$0xff]
        %v264 = vld [vmem:[%s153 + $0x290] sm:$0xff]
        %v265 = vld [vmem:[%s153 + $0x298] sm:$0xff]
        %v266 = vld [vmem:[%s153 + $0x2a0] sm:$0xff]
        %v267 = vld [vmem:[%s153 + $0x2a8] sm:$0xff]
        %v268 = vld [vmem:[%s153 + $0x2b0] sm:$0xff]
        %v269 = vld [vmem:[%s153 + $0x2b8] sm:$0xff]
        %v270 = vld [vmem:[%s153 + $0x2c0] sm:$0xff]
        %v271 = vld [vmem:[%s153 + $0x2c8] sm:$0xff]
        %v272 = vld [vmem:[%s153 + $0x2d0] sm:$0xff]
        %v273 = vld [vmem:[%s153 + $0x2d8] sm:$0xff]
        %v274 = vld [vmem:[%s153 + $0x2e0] sm:$0xff]
        %v275 = vld [vmem:[%s153 + $0x2e8] sm:$0xff]
        %v276 = vld [vmem:[%s153 + $0x2f0] sm:$0xff]
        %v277 = vld [vmem:[%s153 + $0x2f8] sm:$0xff]
        %v278 = vld [vmem:[%s153 + $0x300] sm:$0xff]
        %v279 = vld [vmem:[%s153 + $0x308] sm:$0xff]
        %v280 = vld [vmem:[%s153 + $0x310] sm:$0xff]
        %v281 = vld [vmem:[%s153 + $0x318] sm:$0xff]
        %v282 = vld [vmem:[%s153 + $0x320] sm:$0xff]
        %v283 = vld [vmem:[%s153 + $0x328] sm:$0xff]
        %v284 = vld [vmem:[%s153 + $0x330] sm:$0xff]
        %v285 = vld [vmem:[%s153 + $0x338] sm:$0xff]
        %v286 = vld [vmem:[%s153 + $0x340] sm:$0xff]
        %v287 = vld [vmem:[%s153 + $0x348] sm:$0xff]
        %v288 = vld [vmem:[%s153 + $0x350] sm:$0xff]
        %v289 = vld [vmem:[%s153 + $0x358] sm:$0xff]
        %v290 = vld [vmem:[%s153 + $0x360] sm:$0xff]
        %v291 = vld [vmem:[%s153 + $0x368] sm:$0xff]
        %v292 = vld [vmem:[%s153 + $0x370] sm:$0xff]
        %v293 = vld [vmem:[%s153 + $0x378] sm:$0xff]
        %v294 = vld [vmem:[%s153 + $0x380] sm:$0xff]
        %v295 = vld [vmem:[%s153 + $0x388] sm:$0xff]
        %v296 = vld [vmem:[%s153 + $0x390] sm:$0xff]
        %v297 = vld [vmem:[%s153 + $0x398] sm:$0xff]
        %v298 = vld [vmem:[%s153 + $0x3a0] sm:$0xff]
        %v299 = vld [vmem:[%s153 + $0x3a8] sm:$0xff]
        %v300 = vld [vmem:[%s153 + $0x3b0] sm:$0xff]
        %v301 = vld [vmem:[%s153 + $0x3b8] sm:$0xff]
        %v302 = vld [vmem:[%s153 + $0x3c0] sm:$0xff]
        %v303 = vld [vmem:[%s153 + $0x3c8] sm:$0xff]
        %v304 = vld [vmem:[%s153 + $0x3d0] sm:$0xff]
        %v305 = vld [vmem:[%s153 + $0x3d8] sm:$0xff]
        %v306 = vld [vmem:[%s153 + $0x3e0] sm:$0xff]
        %v307 = vld [vmem:[%s153 + $0x3e8] sm:$0xff]
        %v308 = vld [vmem:[%s153 + $0x3f0] sm:$0xff]
        %v309 = vld [vmem:[%s153 + $0x3f8] sm:$0xff]
        %v310 = vld [vmem:[#allocation5] sm:$0xff]
        %v311 = vld [vmem:[#allocation5 + $0x8] sm:$0xff]
        %v312 = vld [vmem:[#allocation5 + $0x10] sm:$0xff]
        %v313 = vld [vmem:[#allocation5 + $0x18] sm:$0xff]
        %v314 = vld [vmem:[#allocation5 + $0x20] sm:$0xff]
        %v315 = vld [vmem:[#allocation5 + $0x28] sm:$0xff]
        %v316 = vld [vmem:[#allocation5 + $0x30] sm:$0xff]
        %v317 = vld [vmem:[#allocation5 + $0x38] sm:$0xff]
        %v318 = vld [vmem:[#allocation5 + $0x40] sm:$0xff]
        %v319 = vld [vmem:[#allocation5 + $0x48] sm:$0xff]
        %v320 = vld [vmem:[#allocation5 + $0x50] sm:$0xff]
        %v321 = vld [vmem:[#allocation5 + $0x58] sm:$0xff]
        %v322 = vld [vmem:[#allocation5 + $0x60] sm:$0xff]
        %v323 = vld [vmem:[#allocation5 + $0x68] sm:$0xff]
        %v324 = vld [vmem:[#allocation5 + $0x70] sm:$0xff]
        %v325 = vld [vmem:[#allocation5 + $0x78] sm:$0xff]
        %v326 = vld [vmem:[#allocation5 + $0x80] sm:$0xff]
        %v327 = vld [vmem:[#allocation5 + $0x88] sm:$0xff]
        %v328 = vld [vmem:[#allocation5 + $0x90] sm:$0xff]
        %v329 = vld [vmem:[#allocation5 + $0x98] sm:$0xff]
        %v330 = vld [vmem:[#allocation5 + $0xa0] sm:$0xff]
        %v331 = vld [vmem:[#allocation5 + $0xa8] sm:$0xff]
        %v332 = vld [vmem:[#allocation5 + $0xb0] sm:$0xff]
        %v333 = vld [vmem:[#allocation5 + $0xb8] sm:$0xff]
        %v334 = vld [vmem:[#allocation5 + $0xc0] sm:$0xff]
        %v335 = vld [vmem:[#allocation5 + $0xc8] sm:$0xff]
        %v336 = vld [vmem:[#allocation5 + $0xd0] sm:$0xff]
        %v337 = vld [vmem:[#allocation5 + $0xd8] sm:$0xff]
        %v338 = vld [vmem:[#allocation5 + $0xe0] sm:$0xff]
        %v339 = vld [vmem:[#allocation5 + $0xe8] sm:$0xff]
        %v340 = vld [vmem:[#allocation5 + $0xf0] sm:$0xff]
        %v341 = vld [vmem:[#allocation5 + $0xf8] sm:$0xff]
        %v342 = vld [vmem:[#allocation5 + $0x100] sm:$0xff]
        %v343 = vld [vmem:[#allocation5 + $0x108] sm:$0xff]
        %v344 = vld [vmem:[#allocation5 + $0x110] sm:$0xff]
        %v345 = vld [vmem:[#allocation5 + $0x118] sm:$0xff]
        %v346 = vld [vmem:[#allocation5 + $0x120] sm:$0xff]
        %v347 = vld [vmem:[#allocation5 + $0x128] sm:$0xff]
        %v348 = vld [vmem:[#allocation5 + $0x130] sm:$0xff]
        %v349 = vld [vmem:[#allocation5 + $0x138] sm:$0xff]
        %v350 = vld [vmem:[#allocation5 + $0x140] sm:$0xff]
        %v351 = vld [vmem:[#allocation5 + $0x148] sm:$0xff]
        %v352 = vld [vmem:[#allocation5 + $0x150] sm:$0xff]
        %v353 = vld [vmem:[#allocation5 + $0x158] sm:$0xff]
        %v354 = vld [vmem:[#allocation5 + $0x160] sm:$0xff]
        %v355 = vld [vmem:[#allocation5 + $0x168] sm:$0xff]
        %v356 = vld [vmem:[#allocation5 + $0x170] sm:$0xff]
        %v357 = vld [vmem:[#allocation5 + $0x178] sm:$0xff]
        %v358 = vld [vmem:[#allocation5 + $0x180] sm:$0xff]
        %v359 = vld [vmem:[#allocation5 + $0x188] sm:$0xff]
        %v360 = vld [vmem:[#allocation5 + $0x190] sm:$0xff]
        %v361 = vld [vmem:[#allocation5 + $0x198] sm:$0xff]
        %v362 = vld [vmem:[#allocation5 + $0x1a0] sm:$0xff]
        %v363 = vld [vmem:[#allocation5 + $0x1a8] sm:$0xff]
        %v364 = vld [vmem:[#allocation5 + $0x1b0] sm:$0xff]
        %v365 = vld [vmem:[#allocation5 + $0x1b8] sm:$0xff]
        %v366 = vld [vmem:[#allocation5 + $0x1c0] sm:$0xff]
        %v367 = vld [vmem:[#allocation5 + $0x1c8] sm:$0xff]
        %v368 = vld [vmem:[#allocation5 + $0x1d0] sm:$0xff]
        %v369 = vld [vmem:[#allocation5 + $0x1d8] sm:$0xff]
        %v370 = vld [vmem:[#allocation5 + $0x1e0] sm:$0xff]
        %v371 = vld [vmem:[#allocation5 + $0x1e8] sm:$0xff]
        %v372 = vld [vmem:[#allocation5 + $0x1f0] sm:$0xff]
        %v373 = vld [vmem:[#allocation5 + $0x1f8] sm:$0xff]
        %v374 = vld [vmem:[#allocation5 + $0x200] sm:$0xff]
        %v375 = vld [vmem:[#allocation5 + $0x208] sm:$0xff]
        %v376 = vld [vmem:[#allocation5 + $0x210] sm:$0xff]
        %v377 = vld [vmem:[#allocation5 + $0x218] sm:$0xff]
        %v378 = vld [vmem:[#allocation5 + $0x220] sm:$0xff]
        %v379 = vld [vmem:[#allocation5 + $0x228] sm:$0xff]
        %v380 = vld [vmem:[#allocation5 + $0x230] sm:$0xff]
        %v381 = vld [vmem:[#allocation5 + $0x238] sm:$0xff]
        %v382 = vld [vmem:[#allocation5 + $0x240] sm:$0xff]
        %v383 = vld [vmem:[#allocation5 + $0x248] sm:$0xff]
        %v384 = vld [vmem:[#allocation5 + $0x250] sm:$0xff]
        %v385 = vld [vmem:[#allocation5 + $0x258] sm:$0xff]
        %v386 = vld [vmem:[#allocation5 + $0x260] sm:$0xff]
        %v387 = vld [vmem:[#allocation5 + $0x268] sm:$0xff]
        %v388 = vld [vmem:[#allocation5 + $0x270] sm:$0xff]
        %v389 = vld [vmem:[#allocation5 + $0x278] sm:$0xff]
        %v390 = vld [vmem:[#allocation5 + $0x280] sm:$0xff]
        %v391 = vld [vmem:[#allocation5 + $0x288] sm:$0xff]
        %v392 = vld [vmem:[#allocation5 + $0x290] sm:$0xff]
        %v393 = vld [vmem:[#allocation5 + $0x298] sm:$0xff]
        %v394 = vld [vmem:[#allocation5 + $0x2a0] sm:$0xff]
        %v395 = vld [vmem:[#allocation5 + $0x2a8] sm:$0xff]
        %v396 = vld [vmem:[#allocation5 + $0x2b0] sm:$0xff]
        %v397 = vld [vmem:[#allocation5 + $0x2b8] sm:$0xff]
        %v398 = vld [vmem:[#allocation5 + $0x2c0] sm:$0xff]
        %v399 = vld [vmem:[#allocation5 + $0x2c8] sm:$0xff]
        %v400 = vld [vmem:[#allocation5 + $0x2d0] sm:$0xff]
        %v401 = vld [vmem:[#allocation5 + $0x2d8] sm:$0xff]
        %v402 = vld [vmem:[#allocation5 + $0x2e0] sm:$0xff]
        %v403 = vld [vmem:[#allocation5 + $0x2e8] sm:$0xff]
        %v404 = vld [vmem:[#allocation5 + $0x2f0] sm:$0xff]
        %v405 = vld [vmem:[#allocation5 + $0x2f8] sm:$0xff]
        %v406 = vld [vmem:[#allocation5 + $0x300] sm:$0xff]
        %v407 = vld [vmem:[#allocation5 + $0x308] sm:$0xff]
        %v408 = vld [vmem:[#allocation5 + $0x310] sm:$0xff]
        %v409 = vld [vmem:[#allocation5 + $0x318] sm:$0xff]
        %v410 = vld [vmem:[#allocation5 + $0x320] sm:$0xff]
        %v411 = vld [vmem:[#allocation5 + $0x328] sm:$0xff]
        %v412 = vld [vmem:[#allocation5 + $0x330] sm:$0xff]
        %v413 = vld [vmem:[#allocation5 + $0x338] sm:$0xff]
        %v414 = vld [vmem:[#allocation5 + $0x340] sm:$0xff]
        %v415 = vld [vmem:[#allocation5 + $0x348] sm:$0xff]
        %v416 = vld [vmem:[#allocation5 + $0x350] sm:$0xff]
        %v417 = vld [vmem:[#allocation5 + $0x358] sm:$0xff]
        %v418 = vld [vmem:[#allocation5 + $0x360] sm:$0xff]
        %v419 = vld [vmem:[#allocation5 + $0x368] sm:$0xff]
        %v420 = vld [vmem:[#allocation5 + $0x370] sm:$0xff]
        %v421 = vld [vmem:[#allocation5 + $0x378] sm:$0xff]
        %v422 = vld [vmem:[#allocation5 + $0x380] sm:$0xff]
        %v423 = vld [vmem:[#allocation5 + $0x388] sm:$0xff]
        %v424 = vld [vmem:[#allocation5 + $0x390] sm:$0xff]
        %v425 = vld [vmem:[#allocation5 + $0x398] sm:$0xff]
        %v426 = vld [vmem:[#allocation5 + $0x3a0] sm:$0xff]
        %v427 = vld [vmem:[#allocation5 + $0x3a8] sm:$0xff]
        %v428 = vld [vmem:[#allocation5 + $0x3b0] sm:$0xff]
        %v429 = vld [vmem:[#allocation5 + $0x3b8] sm:$0xff]
        %v430 = vld [vmem:[#allocation5 + $0x3c0] sm:$0xff]
        %v431 = vld [vmem:[#allocation5 + $0x3c8] sm:$0xff]
        %v432 = vld [vmem:[#allocation5 + $0x3d0] sm:$0xff]
        %v433 = vld [vmem:[#allocation5 + $0x3d8] sm:$0xff]
        %v434 = vld [vmem:[#allocation5 + $0x3e0] sm:$0xff]
        %v435 = vld [vmem:[#allocation5 + $0x3e8] sm:$0xff]
        %v436 = vld [vmem:[#allocation5 + $0x3f0] sm:$0xff]
        %v437 = vld [vmem:[#allocation5 + $0x3f8] sm:$0xff]
        %v438 = vld [vmem:[#allocation5 + $0x400] sm:$0xff]
        %v439 = vld [vmem:[#allocation5 + $0x408] sm:$0xff]
        %v440 = vld [vmem:[#allocation5 + $0x410] sm:$0xff]
        %v441 = vld [vmem:[#allocation5 + $0x418] sm:$0xff]
        %v442 = vld [vmem:[#allocation5 + $0x420] sm:$0xff]
        %v443 = vld [vmem:[#allocation5 + $0x428] sm:$0xff]
        %v444 = vld [vmem:[#allocation5 + $0x430] sm:$0xff]
        %v445 = vld [vmem:[#allocation5 + $0x438] sm:$0xff]
        %v446 = vld [vmem:[#allocation5 + $0x440] sm:$0xff]
        %v447 = vld [vmem:[#allocation5 + $0x448] sm:$0xff]
        %v448 = vld [vmem:[#allocation5 + $0x450] sm:$0xff]
        %v449 = vld [vmem:[#allocation5 + $0x458] sm:$0xff]
        %v450 = vld [vmem:[#allocation5 + $0x460] sm:$0xff]
        %v451 = vld [vmem:[#allocation5 + $0x468] sm:$0xff]
        %v452 = vld [vmem:[#allocation5 + $0x470] sm:$0xff]
        %v453 = vld [vmem:[#allocation5 + $0x478] sm:$0xff]
        %v454 = vld [vmem:[#allocation5 + $0x480] sm:$0xff]
        %v455 = vld [vmem:[#allocation5 + $0x488] sm:$0xff]
        %v456 = vld [vmem:[#allocation5 + $0x490] sm:$0xff]
        %v457 = vld [vmem:[#allocation5 + $0x498] sm:$0xff]
        %v458 = vld [vmem:[#allocation5 + $0x4a0] sm:$0xff]
        %v459 = vld [vmem:[#allocation5 + $0x4a8] sm:$0xff]
        %v460 = vld [vmem:[#allocation5 + $0x4b0] sm:$0xff]
        %v461 = vld [vmem:[#allocation5 + $0x4b8] sm:$0xff]
        %v462 = vld [vmem:[#allocation5 + $0x4c0] sm:$0xff]
        %v463 = vld [vmem:[#allocation5 + $0x4c8] sm:$0xff]
        %v464 = vld [vmem:[#allocation5 + $0x4d0] sm:$0xff]
        %v465 = vld [vmem:[#allocation5 + $0x4d8] sm:$0xff]
        %v466 = vld [vmem:[#allocation5 + $0x4e0] sm:$0xff]
        %v467 = vld [vmem:[#allocation5 + $0x4e8] sm:$0xff]
        %v468 = vld [vmem:[#allocation5 + $0x4f0] sm:$0xff]
        %v469 = vld [vmem:[#allocation5 + $0x4f8] sm:$0xff]
        %v470 = vld [vmem:[#allocation5 + $0x500] sm:$0xff]
        %v471 = vld [vmem:[#allocation5 + $0x508] sm:$0xff]
        %v472 = vld [vmem:[#allocation5 + $0x510] sm:$0xff]
        %v473 = vld [vmem:[#allocation5 + $0x518] sm:$0xff]
        %v474 = vld [vmem:[#allocation5 + $0x520] sm:$0xff]
        %v475 = vld [vmem:[#allocation5 + $0x528] sm:$0xff]
        %v476 = vld [vmem:[#allocation5 + $0x530] sm:$0xff]
        %v477 = vld [vmem:[#allocation5 + $0x538] sm:$0xff]
        %v478 = vld [vmem:[#allocation5 + $0x540] sm:$0xff]
        %v479 = vld [vmem:[#allocation5 + $0x548] sm:$0xff]
        %v480 = vld [vmem:[#allocation5 + $0x550] sm:$0xff]
        %v481 = vld [vmem:[#allocation5 + $0x558] sm:$0xff]
        %v482 = vld [vmem:[#allocation5 + $0x560] sm:$0xff]
        %v483 = vld [vmem:[#allocation5 + $0x568] sm:$0xff]
        %v484 = vld [vmem:[#allocation5 + $0x570] sm:$0xff]
        %v485 = vld [vmem:[#allocation5 + $0x578] sm:$0xff]
        %v486 = vld [vmem:[#allocation5 + $0x580] sm:$0xff]
        %v487 = vld [vmem:[#allocation5 + $0x588] sm:$0xff]
        %v488 = vld [vmem:[#allocation5 + $0x590] sm:$0xff]
        %v489 = vld [vmem:[#allocation5 + $0x598] sm:$0xff]
        %v490 = vld [vmem:[#allocation5 + $0x5a0] sm:$0xff]
        %v491 = vld [vmem:[#allocation5 + $0x5a8] sm:$0xff]
        %v492 = vld [vmem:[#allocation5 + $0x5b0] sm:$0xff]
        %v493 = vld [vmem:[#allocation5 + $0x5b8] sm:$0xff]
        %v494 = vld [vmem:[#allocation5 + $0x5c0] sm:$0xff]
        %v495 = vld [vmem:[#allocation5 + $0x5c8] sm:$0xff]
        %v496 = vld [vmem:[#allocation5 + $0x5d0] sm:$0xff]
        %v497 = vld [vmem:[#allocation5 + $0x5d8] sm:$0xff]
        %v498 = vld [vmem:[#allocation5 + $0x5e0] sm:$0xff]
        %v499 = vld [vmem:[#allocation5 + $0x5e8] sm:$0xff]
        %v500 = vld [vmem:[#allocation5 + $0x5f0] sm:$0xff]
        %v501 = vld [vmem:[#allocation5 + $0x5f8] sm:$0xff]
        %v502 = vld [vmem:[#allocation5 + $0x600] sm:$0xff]
        %v503 = vld [vmem:[#allocation5 + $0x608] sm:$0xff]
        %v504 = vld [vmem:[#allocation5 + $0x610] sm:$0xff]
        %v505 = vld [vmem:[#allocation5 + $0x618] sm:$0xff]
        %v506 = vld [vmem:[#allocation5 + $0x620] sm:$0xff]
        %v507 = vld [vmem:[#allocation5 + $0x628] sm:$0xff]
        %v508 = vld [vmem:[#allocation5 + $0x630] sm:$0xff]
        %v509 = vld [vmem:[#allocation5 + $0x638] sm:$0xff]
        %v510 = vld [vmem:[#allocation5 + $0x640] sm:$0xff]
        %v511 = vld [vmem:[#allocation5 + $0x648] sm:$0xff]
        %v512 = vld [vmem:[#allocation5 + $0x650] sm:$0xff]
        %v513 = vld [vmem:[#allocation5 + $0x658] sm:$0xff]
        %v514 = vld [vmem:[#allocation5 + $0x660] sm:$0xff]
        %v515 = vld [vmem:[#allocation5 + $0x668] sm:$0xff]
        %v516 = vld [vmem:[#allocation5 + $0x670] sm:$0xff]
        %v517 = vld [vmem:[#allocation5 + $0x678] sm:$0xff]
        %v518 = vld [vmem:[#allocation5 + $0x680] sm:$0xff]
        %v519 = vld [vmem:[#allocation5 + $0x688] sm:$0xff]
        %v520 = vld [vmem:[#allocation5 + $0x690] sm:$0xff]
        %v521 = vld [vmem:[#allocation5 + $0x698] sm:$0xff]
        %v522 = vld [vmem:[#allocation5 + $0x6a0] sm:$0xff]
        %v523 = vld [vmem:[#allocation5 + $0x6a8] sm:$0xff]
        %v524 = vld [vmem:[#allocation5 + $0x6b0] sm:$0xff]
        %v525 = vld [vmem:[#allocation5 + $0x6b8] sm:$0xff]
        %v526 = vld [vmem:[#allocation5 + $0x6c0] sm:$0xff]
        %v527 = vld [vmem:[#allocation5 + $0x6c8] sm:$0xff]
        %v528 = vld [vmem:[#allocation5 + $0x6d0] sm:$0xff]
        %v529 = vld [vmem:[#allocation5 + $0x6d8] sm:$0xff]
        %v530 = vld [vmem:[#allocation5 + $0x6e0] sm:$0xff]
        %v531 = vld [vmem:[#allocation5 + $0x6e8] sm:$0xff]
        %v532 = vld [vmem:[#allocation5 + $0x6f0] sm:$0xff]
        %v533 = vld [vmem:[#allocation5 + $0x6f8] sm:$0xff]
        %v534 = vld [vmem:[#allocation5 + $0x700] sm:$0xff]
        %v535 = vld [vmem:[#allocation5 + $0x708] sm:$0xff]
        %v536 = vld [vmem:[#allocation5 + $0x710] sm:$0xff]
        %v537 = vld [vmem:[#allocation5 + $0x718] sm:$0xff]
        %v538 = vld [vmem:[#allocation5 + $0x720] sm:$0xff]
        %v539 = vld [vmem:[#allocation5 + $0x728] sm:$0xff]
        %v540 = vld [vmem:[#allocation5 + $0x730] sm:$0xff]
        %v541 = vld [vmem:[#allocation5 + $0x738] sm:$0xff]
        %v542 = vld [vmem:[#allocation5 + $0x740] sm:$0xff]
        %v543 = vld [vmem:[#allocation5 + $0x748] sm:$0xff]
        %v544 = vld [vmem:[#allocation5 + $0x750] sm:$0xff]
        %v545 = vld [vmem:[#allocation5 + $0x758] sm:$0xff]
        %v546 = vld [vmem:[#allocation5 + $0x760] sm:$0xff]
        %v547 = vld [vmem:[#allocation5 + $0x768] sm:$0xff]
        %v548 = vld [vmem:[#allocation5 + $0x770] sm:$0xff]
        %v549 = vld [vmem:[#allocation5 + $0x778] sm:$0xff]
        %v550 = vld [vmem:[#allocation5 + $0x780] sm:$0xff]
        %v551 = vld [vmem:[#allocation5 + $0x788] sm:$0xff]
        %v552 = vld [vmem:[#allocation5 + $0x790] sm:$0xff]
        %v553 = vld [vmem:[#allocation5 + $0x798] sm:$0xff]
        %v554 = vld [vmem:[#allocation5 + $0x7a0] sm:$0xff]
        %v555 = vld [vmem:[#allocation5 + $0x7a8] sm:$0xff]
        %v556 = vld [vmem:[#allocation5 + $0x7b0] sm:$0xff]
        %v557 = vld [vmem:[#allocation5 + $0x7b8] sm:$0xff]
        %v558 = vld [vmem:[#allocation5 + $0x7c0] sm:$0xff]
        %v559 = vld [vmem:[#allocation5 + $0x7c8] sm:$0xff]
        %v560 = vld [vmem:[#allocation5 + $0x7d0] sm:$0xff]
        %v561 = vld [vmem:[#allocation5 + $0x7d8] sm:$0xff]
        %v562 = vld [vmem:[#allocation5 + $0x7e0] sm:$0xff]
        %v563 = vld [vmem:[#allocation5 + $0x7e8] sm:$0xff]
        %v564 = vld [vmem:[#allocation5 + $0x7f0] sm:$0xff]
        %v565 = vld [vmem:[#allocation5 + $0x7f8] sm:$0xff]
        %v566 = vunpack.c.l.bf16 %v310
        %v567 = vunpack.c.h.bf16 %v310
        %v568 = vunpack.c.l.bf16 %v311
        %v569 = vunpack.c.h.bf16 %v311
        %v570 = vunpack.c.l.bf16 %v312
        %v571 = vunpack.c.h.bf16 %v312
        %v572 = vunpack.c.l.bf16 %v313
        %v573 = vunpack.c.h.bf16 %v313
        %v574 = vunpack.c.l.bf16 %v314
        %v575 = vunpack.c.h.bf16 %v314
        %v576 = vunpack.c.l.bf16 %v315
        %v577 = vunpack.c.h.bf16 %v315
        %v578 = vunpack.c.l.bf16 %v316
        %v579 = vunpack.c.h.bf16 %v316
        %v580 = vunpack.c.l.bf16 %v317
        %v581 = vunpack.c.h.bf16 %v317
        %v582 = vunpack.c.l.bf16 %v318
        %v583 = vunpack.c.h.bf16 %v318
        %v584 = vunpack.c.l.bf16 %v319
        %v585 = vunpack.c.h.bf16 %v319
        %v586 = vunpack.c.l.bf16 %v320
        %v587 = vunpack.c.h.bf16 %v320
        %v588 = vunpack.c.l.bf16 %v321
        %v589 = vunpack.c.h.bf16 %v321
        %v590 = vunpack.c.l.bf16 %v322
        %v591 = vunpack.c.h.bf16 %v322
        %v592 = vunpack.c.l.bf16 %v323
        %v593 = vunpack.c.h.bf16 %v323
        %v594 = vunpack.c.l.bf16 %v324
        %v595 = vunpack.c.h.bf16 %v324
        %v596 = vunpack.c.l.bf16 %v325
        %v597 = vunpack.c.h.bf16 %v325
        %v598 = vunpack.c.l.bf16 %v326
        %v599 = vunpack.c.h.bf16 %v326
        %v600 = vunpack.c.l.bf16 %v327
        %v601 = vunpack.c.h.bf16 %v327
        %v602 = vunpack.c.l.bf16 %v328
        %v603 = vunpack.c.h.bf16 %v328
        %v604 = vunpack.c.l.bf16 %v329
        %v605 = vunpack.c.h.bf16 %v329
        %v606 = vunpack.c.l.bf16 %v330
        %v607 = vunpack.c.h.bf16 %v330
        %v608 = vunpack.c.l.bf16 %v331
        %v609 = vunpack.c.h.bf16 %v331
        %v610 = vunpack.c.l.bf16 %v332
        %v611 = vunpack.c.h.bf16 %v332
        %v612 = vunpack.c.l.bf16 %v333
        %v613 = vunpack.c.h.bf16 %v333
        %v614 = vunpack.c.l.bf16 %v334
        %v615 = vunpack.c.h.bf16 %v334
        %v616 = vunpack.c.l.bf16 %v335
        %v617 = vunpack.c.h.bf16 %v335
        %v618 = vunpack.c.l.bf16 %v336
        %v619 = vunpack.c.h.bf16 %v336
        %v620 = vunpack.c.l.bf16 %v337
        %v621 = vunpack.c.h.bf16 %v337
        %v622 = vunpack.c.l.bf16 %v338
        %v623 = vunpack.c.h.bf16 %v338
        %v624 = vunpack.c.l.bf16 %v339
        %v625 = vunpack.c.h.bf16 %v339
        %v626 = vunpack.c.l.bf16 %v340
        %v627 = vunpack.c.h.bf16 %v340
        %v628 = vunpack.c.l.bf16 %v341
        %v629 = vunpack.c.h.bf16 %v341
        %v630 = vunpack.c.l.bf16 %v342
        %v631 = vunpack.c.h.bf16 %v342
        %v632 = vunpack.c.l.bf16 %v343
        %v633 = vunpack.c.h.bf16 %v343
        %v634 = vunpack.c.l.bf16 %v344
        %v635 = vunpack.c.h.bf16 %v344
        %v636 = vunpack.c.l.bf16 %v345
        %v637 = vunpack.c.h.bf16 %v345
        %v638 = vunpack.c.l.bf16 %v346
        %v639 = vunpack.c.h.bf16 %v346
        %v640 = vunpack.c.l.bf16 %v347
        %v641 = vunpack.c.h.bf16 %v347
        %v642 = vunpack.c.l.bf16 %v348
        %v643 = vunpack.c.h.bf16 %v348
        %v644 = vunpack.c.l.bf16 %v349
        %v645 = vunpack.c.h.bf16 %v349
        %v646 = vunpack.c.l.bf16 %v350
        %v647 = vunpack.c.h.bf16 %v350
        %v648 = vunpack.c.l.bf16 %v351
        %v649 = vunpack.c.h.bf16 %v351
        %v650 = vunpack.c.l.bf16 %v352
        %v651 = vunpack.c.h.bf16 %v352
        %v652 = vunpack.c.l.bf16 %v353
        %v653 = vunpack.c.h.bf16 %v353
        %v654 = vunpack.c.l.bf16 %v354
        %v655 = vunpack.c.h.bf16 %v354
        %v656 = vunpack.c.l.bf16 %v355
        %v657 = vunpack.c.h.bf16 %v355
        %v658 = vunpack.c.l.bf16 %v356
        %v659 = vunpack.c.h.bf16 %v356
        %v660 = vunpack.c.l.bf16 %v357
        %v661 = vunpack.c.h.bf16 %v357
        %v662 = vunpack.c.l.bf16 %v358
        %v663 = vunpack.c.h.bf16 %v358
        %v664 = vunpack.c.l.bf16 %v359
        %v665 = vunpack.c.h.bf16 %v359
        %v666 = vunpack.c.l.bf16 %v360
        %v667 = vunpack.c.h.bf16 %v360
        %v668 = vunpack.c.l.bf16 %v361
        %v669 = vunpack.c.h.bf16 %v361
        %v670 = vunpack.c.l.bf16 %v362
        %v671 = vunpack.c.h.bf16 %v362
        %v672 = vunpack.c.l.bf16 %v363
        %v673 = vunpack.c.h.bf16 %v363
        %v674 = vunpack.c.l.bf16 %v364
        %v675 = vunpack.c.h.bf16 %v364
        %v676 = vunpack.c.l.bf16 %v365
        %v677 = vunpack.c.h.bf16 %v365
        %v678 = vunpack.c.l.bf16 %v366
        %v679 = vunpack.c.h.bf16 %v366
        %v680 = vunpack.c.l.bf16 %v367
        %v681 = vunpack.c.h.bf16 %v367
        %v682 = vunpack.c.l.bf16 %v368
        %v683 = vunpack.c.h.bf16 %v368
        %v684 = vunpack.c.l.bf16 %v369
        %v685 = vunpack.c.h.bf16 %v369
        %v686 = vunpack.c.l.bf16 %v370
        %v687 = vunpack.c.h.bf16 %v370
        %v688 = vunpack.c.l.bf16 %v371
        %v689 = vunpack.c.h.bf16 %v371
        %v690 = vunpack.c.l.bf16 %v372
        %v691 = vunpack.c.h.bf16 %v372
        %v692 = vunpack.c.l.bf16 %v373
        %v693 = vunpack.c.h.bf16 %v373
        %v694 = vunpack.c.l.bf16 %v374
        %v695 = vunpack.c.h.bf16 %v374
        %v696 = vunpack.c.l.bf16 %v375
        %v697 = vunpack.c.h.bf16 %v375
        %v698 = vunpack.c.l.bf16 %v376
        %v699 = vunpack.c.h.bf16 %v376
        %v700 = vunpack.c.l.bf16 %v377
        %v701 = vunpack.c.h.bf16 %v377
        %v702 = vunpack.c.l.bf16 %v378
        %v703 = vunpack.c.h.bf16 %v378
        %v704 = vunpack.c.l.bf16 %v379
        %v705 = vunpack.c.h.bf16 %v379
        %v706 = vunpack.c.l.bf16 %v380
        %v707 = vunpack.c.h.bf16 %v380
        %v708 = vunpack.c.l.bf16 %v381
        %v709 = vunpack.c.h.bf16 %v381
        %v710 = vunpack.c.l.bf16 %v382
        %v711 = vunpack.c.h.bf16 %v382
        %v712 = vunpack.c.l.bf16 %v383
        %v713 = vunpack.c.h.bf16 %v383
        %v714 = vunpack.c.l.bf16 %v384
        %v715 = vunpack.c.h.bf16 %v384
        %v716 = vunpack.c.l.bf16 %v385
        %v717 = vunpack.c.h.bf16 %v385
        %v718 = vunpack.c.l.bf16 %v386
        %v719 = vunpack.c.h.bf16 %v386
        %v720 = vunpack.c.l.bf16 %v387
        %v721 = vunpack.c.h.bf16 %v387
        %v722 = vunpack.c.l.bf16 %v388
        %v723 = vunpack.c.h.bf16 %v388
        %v724 = vunpack.c.l.bf16 %v389
        %v725 = vunpack.c.h.bf16 %v389
        %v726 = vunpack.c.l.bf16 %v390
        %v727 = vunpack.c.h.bf16 %v390
        %v728 = vunpack.c.l.bf16 %v391
        %v729 = vunpack.c.h.bf16 %v391
        %v730 = vunpack.c.l.bf16 %v392
        %v731 = vunpack.c.h.bf16 %v392
        %v732 = vunpack.c.l.bf16 %v393
        %v733 = vunpack.c.h.bf16 %v393
        %v734 = vunpack.c.l.bf16 %v394
        %v735 = vunpack.c.h.bf16 %v394
        %v736 = vunpack.c.l.bf16 %v395
        %v737 = vunpack.c.h.bf16 %v395
        %v738 = vunpack.c.l.bf16 %v396
        %v739 = vunpack.c.h.bf16 %v396
        %v740 = vunpack.c.l.bf16 %v397
        %v741 = vunpack.c.h.bf16 %v397
        %v742 = vunpack.c.l.bf16 %v398
        %v743 = vunpack.c.h.bf16 %v398
        %v744 = vunpack.c.l.bf16 %v399
        %v745 = vunpack.c.h.bf16 %v399
        %v746 = vunpack.c.l.bf16 %v400
        %v747 = vunpack.c.h.bf16 %v400
        %v748 = vunpack.c.l.bf16 %v401
        %v749 = vunpack.c.h.bf16 %v401
        %v750 = vunpack.c.l.bf16 %v402
        %v751 = vunpack.c.h.bf16 %v402
        %v752 = vunpack.c.l.bf16 %v403
        %v753 = vunpack.c.h.bf16 %v403
        %v754 = vunpack.c.l.bf16 %v404
        %v755 = vunpack.c.h.bf16 %v404
        %v756 = vunpack.c.l.bf16 %v405
        %v757 = vunpack.c.h.bf16 %v405
        %v758 = vunpack.c.l.bf16 %v406
        %v759 = vunpack.c.h.bf16 %v406
        %v760 = vunpack.c.l.bf16 %v407
        %v761 = vunpack.c.h.bf16 %v407
        %v762 = vunpack.c.l.bf16 %v408
        %v763 = vunpack.c.h.bf16 %v408
        %v764 = vunpack.c.l.bf16 %v409
        %v765 = vunpack.c.h.bf16 %v409
        %v766 = vunpack.c.l.bf16 %v410
        %v767 = vunpack.c.h.bf16 %v410
        %v768 = vunpack.c.l.bf16 %v411
        %v769 = vunpack.c.h.bf16 %v411
        %v770 = vunpack.c.l.bf16 %v412
        %v771 = vunpack.c.h.bf16 %v412
        %v772 = vunpack.c.l.bf16 %v413
        %v773 = vunpack.c.h.bf16 %v413
        %v774 = vunpack.c.l.bf16 %v414
        %v775 = vunpack.c.h.bf16 %v414
        %v776 = vunpack.c.l.bf16 %v415
        %v777 = vunpack.c.h.bf16 %v415
        %v778 = vunpack.c.l.bf16 %v416
        %v779 = vunpack.c.h.bf16 %v416
        %v780 = vunpack.c.l.bf16 %v417
        %v781 = vunpack.c.h.bf16 %v417
        %v782 = vunpack.c.l.bf16 %v418
        %v783 = vunpack.c.h.bf16 %v418
        %v784 = vunpack.c.l.bf16 %v419
        %v785 = vunpack.c.h.bf16 %v419
        %v786 = vunpack.c.l.bf16 %v420
        %v787 = vunpack.c.h.bf16 %v420
        %v788 = vunpack.c.l.bf16 %v421
        %v789 = vunpack.c.h.bf16 %v421
        %v790 = vunpack.c.l.bf16 %v422
        %v791 = vunpack.c.h.bf16 %v422
        %v792 = vunpack.c.l.bf16 %v423
        %v793 = vunpack.c.h.bf16 %v423
        %v794 = vunpack.c.l.bf16 %v424
        %v795 = vunpack.c.h.bf16 %v424
        %v796 = vunpack.c.l.bf16 %v425
        %v797 = vunpack.c.h.bf16 %v425
        %v798 = vunpack.c.l.bf16 %v426
        %v799 = vunpack.c.h.bf16 %v426
        %v800 = vunpack.c.l.bf16 %v427
        %v801 = vunpack.c.h.bf16 %v427
        %v802 = vunpack.c.l.bf16 %v428
        %v803 = vunpack.c.h.bf16 %v428
        %v804 = vunpack.c.l.bf16 %v429
        %v805 = vunpack.c.h.bf16 %v429
        %v806 = vunpack.c.l.bf16 %v430
        %v807 = vunpack.c.h.bf16 %v430
        %v808 = vunpack.c.l.bf16 %v431
        %v809 = vunpack.c.h.bf16 %v431
        %v810 = vunpack.c.l.bf16 %v432
        %v811 = vunpack.c.h.bf16 %v432
        %v812 = vunpack.c.l.bf16 %v433
        %v813 = vunpack.c.h.bf16 %v433
        %v814 = vunpack.c.l.bf16 %v434
        %v815 = vunpack.c.h.bf16 %v434
        %v816 = vunpack.c.l.bf16 %v435
        %v817 = vunpack.c.h.bf16 %v435
        %v818 = vunpack.c.l.bf16 %v436
        %v819 = vunpack.c.h.bf16 %v436
        %v820 = vunpack.c.l.bf16 %v437
        %v821 = vunpack.c.h.bf16 %v437
        %v822 = vunpack.c.l.bf16 %v438
        %v823 = vunpack.c.h.bf16 %v438
        %v824 = vunpack.c.l.bf16 %v439
        %v825 = vunpack.c.h.bf16 %v439
        %v826 = vunpack.c.l.bf16 %v440
        %v827 = vunpack.c.h.bf16 %v440
        %v828 = vunpack.c.l.bf16 %v441
        %v829 = vunpack.c.h.bf16 %v441
        %v830 = vunpack.c.l.bf16 %v442
        %v831 = vunpack.c.h.bf16 %v442
        %v832 = vunpack.c.l.bf16 %v443
        %v833 = vunpack.c.h.bf16 %v443
        %v834 = vunpack.c.l.bf16 %v444
        %v835 = vunpack.c.h.bf16 %v444
        %v836 = vunpack.c.l.bf16 %v445
        %v837 = vunpack.c.h.bf16 %v445
        %v838 = vunpack.c.l.bf16 %v446
        %v839 = vunpack.c.h.bf16 %v446
        %v840 = vunpack.c.l.bf16 %v447
        %v841 = vunpack.c.h.bf16 %v447
        %v842 = vunpack.c.l.bf16 %v448
        %v843 = vunpack.c.h.bf16 %v448
        %v844 = vunpack.c.l.bf16 %v449
        %v845 = vunpack.c.h.bf16 %v449
        %v846 = vunpack.c.l.bf16 %v450
        %v847 = vunpack.c.h.bf16 %v450
        %v848 = vunpack.c.l.bf16 %v451
        %v849 = vunpack.c.h.bf16 %v451
        %v850 = vunpack.c.l.bf16 %v452
        %v851 = vunpack.c.h.bf16 %v452
        %v852 = vunpack.c.l.bf16 %v453
        %v853 = vunpack.c.h.bf16 %v453
        %v854 = vunpack.c.l.bf16 %v454
        %v855 = vunpack.c.h.bf16 %v454
        %v856 = vunpack.c.l.bf16 %v455
        %v857 = vunpack.c.h.bf16 %v455
        %v858 = vunpack.c.l.bf16 %v456
        %v859 = vunpack.c.h.bf16 %v456
        %v860 = vunpack.c.l.bf16 %v457
        %v861 = vunpack.c.h.bf16 %v457
        %v862 = vunpack.c.l.bf16 %v458
        %v863 = vunpack.c.h.bf16 %v458
        %v864 = vunpack.c.l.bf16 %v459
        %v865 = vunpack.c.h.bf16 %v459
        %v866 = vunpack.c.l.bf16 %v460
        %v867 = vunpack.c.h.bf16 %v460
        %v868 = vunpack.c.l.bf16 %v461
        %v869 = vunpack.c.h.bf16 %v461
        %v870 = vunpack.c.l.bf16 %v462
        %v871 = vunpack.c.h.bf16 %v462
        %v872 = vunpack.c.l.bf16 %v463
        %v873 = vunpack.c.h.bf16 %v463
        %v874 = vunpack.c.l.bf16 %v464
        %v875 = vunpack.c.h.bf16 %v464
        %v876 = vunpack.c.l.bf16 %v465
        %v877 = vunpack.c.h.bf16 %v465
        %v878 = vunpack.c.l.bf16 %v466
        %v879 = vunpack.c.h.bf16 %v466
        %v880 = vunpack.c.l.bf16 %v467
        %v881 = vunpack.c.h.bf16 %v467
        %v882 = vunpack.c.l.bf16 %v468
        %v883 = vunpack.c.h.bf16 %v468
        %v884 = vunpack.c.l.bf16 %v469
        %v885 = vunpack.c.h.bf16 %v469
        %v886 = vunpack.c.l.bf16 %v470
        %v887 = vunpack.c.h.bf16 %v470
        %v888 = vunpack.c.l.bf16 %v471
        %v889 = vunpack.c.h.bf16 %v471
        %v890 = vunpack.c.l.bf16 %v472
        %v891 = vunpack.c.h.bf16 %v472
        %v892 = vunpack.c.l.bf16 %v473
        %v893 = vunpack.c.h.bf16 %v473
        %v894 = vunpack.c.l.bf16 %v474
        %v895 = vunpack.c.h.bf16 %v474
        %v896 = vunpack.c.l.bf16 %v475
        %v897 = vunpack.c.h.bf16 %v475
        %v898 = vunpack.c.l.bf16 %v476
        %v899 = vunpack.c.h.bf16 %v476
        %v900 = vunpack.c.l.bf16 %v477
        %v901 = vunpack.c.h.bf16 %v477
        %v902 = vunpack.c.l.bf16 %v478
        %v903 = vunpack.c.h.bf16 %v478
        %v904 = vunpack.c.l.bf16 %v479
        %v905 = vunpack.c.h.bf16 %v479
        %v906 = vunpack.c.l.bf16 %v480
        %v907 = vunpack.c.h.bf16 %v480
        %v908 = vunpack.c.l.bf16 %v481
        %v909 = vunpack.c.h.bf16 %v481
        %v910 = vunpack.c.l.bf16 %v482
        %v911 = vunpack.c.h.bf16 %v482
        %v912 = vunpack.c.l.bf16 %v483
        %v913 = vunpack.c.h.bf16 %v483
        %v914 = vunpack.c.l.bf16 %v484
        %v915 = vunpack.c.h.bf16 %v484
        %v916 = vunpack.c.l.bf16 %v485
        %v917 = vunpack.c.h.bf16 %v485
        %v918 = vunpack.c.l.bf16 %v486
        %v919 = vunpack.c.h.bf16 %v486
        %v920 = vunpack.c.l.bf16 %v487
        %v921 = vunpack.c.h.bf16 %v487
        %v922 = vunpack.c.l.bf16 %v488
        %v923 = vunpack.c.h.bf16 %v488
        %v924 = vunpack.c.l.bf16 %v489
        %v925 = vunpack.c.h.bf16 %v489
        %v926 = vunpack.c.l.bf16 %v490
        %v927 = vunpack.c.h.bf16 %v490
        %v928 = vunpack.c.l.bf16 %v491
        %v929 = vunpack.c.h.bf16 %v491
        %v930 = vunpack.c.l.bf16 %v492
        %v931 = vunpack.c.h.bf16 %v492
        %v932 = vunpack.c.l.bf16 %v493
        %v933 = vunpack.c.h.bf16 %v493
        %v934 = vunpack.c.l.bf16 %v494
        %v935 = vunpack.c.h.bf16 %v494
        %v936 = vunpack.c.l.bf16 %v495
        %v937 = vunpack.c.h.bf16 %v495
        %v938 = vunpack.c.l.bf16 %v496
        %v939 = vunpack.c.h.bf16 %v496
        %v940 = vunpack.c.l.bf16 %v497
        %v941 = vunpack.c.h.bf16 %v497
        %v942 = vunpack.c.l.bf16 %v498
        %v943 = vunpack.c.h.bf16 %v498
        %v944 = vunpack.c.l.bf16 %v499
        %v945 = vunpack.c.h.bf16 %v499
        %v946 = vunpack.c.l.bf16 %v500
        %v947 = vunpack.c.h.bf16 %v500
        %v948 = vunpack.c.l.bf16 %v501
        %v949 = vunpack.c.h.bf16 %v501
        %v950 = vunpack.c.l.bf16 %v502
        %v951 = vunpack.c.h.bf16 %v502
        %v952 = vunpack.c.l.bf16 %v503
        %v953 = vunpack.c.h.bf16 %v503
        %v954 = vunpack.c.l.bf16 %v504
        %v955 = vunpack.c.h.bf16 %v504
        %v956 = vunpack.c.l.bf16 %v505
        %v957 = vunpack.c.h.bf16 %v505
        %v958 = vunpack.c.l.bf16 %v506
        %v959 = vunpack.c.h.bf16 %v506
        %v960 = vunpack.c.l.bf16 %v507
        %v961 = vunpack.c.h.bf16 %v507
        %v962 = vunpack.c.l.bf16 %v508
        %v963 = vunpack.c.h.bf16 %v508
        %v964 = vunpack.c.l.bf16 %v509
        %v965 = vunpack.c.h.bf16 %v509
        %v966 = vunpack.c.l.bf16 %v510
        %v967 = vunpack.c.h.bf16 %v510
        %v968 = vunpack.c.l.bf16 %v511
        %v969 = vunpack.c.h.bf16 %v511
        %v970 = vunpack.c.l.bf16 %v512
        %v971 = vunpack.c.h.bf16 %v512
        %v972 = vunpack.c.l.bf16 %v513
        %v973 = vunpack.c.h.bf16 %v513
        %v974 = vunpack.c.l.bf16 %v514
        %v975 = vunpack.c.h.bf16 %v514
        %v976 = vunpack.c.l.bf16 %v515
        %v977 = vunpack.c.h.bf16 %v515
        %v978 = vunpack.c.l.bf16 %v516
        %v979 = vunpack.c.h.bf16 %v516
        %v980 = vunpack.c.l.bf16 %v517
        %v981 = vunpack.c.h.bf16 %v517
        %v982 = vunpack.c.l.bf16 %v518
        %v983 = vunpack.c.h.bf16 %v518
        %v984 = vunpack.c.l.bf16 %v519
        %v985 = vunpack.c.h.bf16 %v519
        %v986 = vunpack.c.l.bf16 %v520
        %v987 = vunpack.c.h.bf16 %v520
        %v988 = vunpack.c.l.bf16 %v521
        %v989 = vunpack.c.h.bf16 %v521
        %v990 = vunpack.c.l.bf16 %v522
        %v991 = vunpack.c.h.bf16 %v522
        %v992 = vunpack.c.l.bf16 %v523
        %v993 = vunpack.c.h.bf16 %v523
        %v994 = vunpack.c.l.bf16 %v524
        %v995 = vunpack.c.h.bf16 %v524
        %v996 = vunpack.c.l.bf16 %v525
        %v997 = vunpack.c.h.bf16 %v525
        %v998 = vunpack.c.l.bf16 %v526
        %v999 = vunpack.c.h.bf16 %v526
        %v1000 = vunpack.c.l.bf16 %v527
        %v1001 = vunpack.c.h.bf16 %v527
        %v1002 = vunpack.c.l.bf16 %v528
        %v1003 = vunpack.c.h.bf16 %v528
        %v1004 = vunpack.c.l.bf16 %v529
        %v1005 = vunpack.c.h.bf16 %v529
        %v1006 = vunpack.c.l.bf16 %v530
        %v1007 = vunpack.c.h.bf16 %v530
        %v1008 = vunpack.c.l.bf16 %v531
        %v1009 = vunpack.c.h.bf16 %v531
        %v1010 = vunpack.c.l.bf16 %v532
        %v1011 = vunpack.c.h.bf16 %v532
        %v1012 = vunpack.c.l.bf16 %v533
        %v1013 = vunpack.c.h.bf16 %v533
        %v1014 = vunpack.c.l.bf16 %v534
        %v1015 = vunpack.c.h.bf16 %v534
        %v1016 = vunpack.c.l.bf16 %v535
        %v1017 = vunpack.c.h.bf16 %v535
        %v1018 = vunpack.c.l.bf16 %v536
        %v1019 = vunpack.c.h.bf16 %v536
        %v1020 = vunpack.c.l.bf16 %v537
        %v1021 = vunpack.c.h.bf16 %v537
        %v1022 = vunpack.c.l.bf16 %v538
        %v1023 = vunpack.c.h.bf16 %v538
        %v1024 = vunpack.c.l.bf16 %v539
        %v1025 = vunpack.c.h.bf16 %v539
        %v1026 = vunpack.c.l.bf16 %v540
        %v1027 = vunpack.c.h.bf16 %v540
        %v1028 = vunpack.c.l.bf16 %v541
        %v1029 = vunpack.c.h.bf16 %v541
        %v1030 = vunpack.c.l.bf16 %v542
        %v1031 = vunpack.c.h.bf16 %v542
        %v1032 = vunpack.c.l.bf16 %v543
        %v1033 = vunpack.c.h.bf16 %v543
        %v1034 = vunpack.c.l.bf16 %v544
        %v1035 = vunpack.c.h.bf16 %v544
        %v1036 = vunpack.c.l.bf16 %v545
        %v1037 = vunpack.c.h.bf16 %v545
        %v1038 = vunpack.c.l.bf16 %v546
        %v1039 = vunpack.c.h.bf16 %v546
        %v1040 = vunpack.c.l.bf16 %v547
        %v1041 = vunpack.c.h.bf16 %v547
        %v1042 = vunpack.c.l.bf16 %v548
        %v1043 = vunpack.c.h.bf16 %v548
        %v1044 = vunpack.c.l.bf16 %v549
        %v1045 = vunpack.c.h.bf16 %v549
        %v1046 = vunpack.c.l.bf16 %v550
        %v1047 = vunpack.c.h.bf16 %v550
        %v1048 = vunpack.c.l.bf16 %v551
        %v1049 = vunpack.c.h.bf16 %v551
        %v1050 = vunpack.c.l.bf16 %v552
        %v1051 = vunpack.c.h.bf16 %v552
        %v1052 = vunpack.c.l.bf16 %v553
        %v1053 = vunpack.c.h.bf16 %v553
        %v1054 = vunpack.c.l.bf16 %v554
        %v1055 = vunpack.c.h.bf16 %v554
        %v1056 = vunpack.c.l.bf16 %v555
        %v1057 = vunpack.c.h.bf16 %v555
        %v1058 = vunpack.c.l.bf16 %v556
        %v1059 = vunpack.c.h.bf16 %v556
        %v1060 = vunpack.c.l.bf16 %v557
        %v1061 = vunpack.c.h.bf16 %v557
        %v1062 = vunpack.c.l.bf16 %v558
        %v1063 = vunpack.c.h.bf16 %v558
        %v1064 = vunpack.c.l.bf16 %v559
        %v1065 = vunpack.c.h.bf16 %v559
        %v1066 = vunpack.c.l.bf16 %v560
        %v1067 = vunpack.c.h.bf16 %v560
        %v1068 = vunpack.c.l.bf16 %v561
        %v1069 = vunpack.c.h.bf16 %v561
        %v1070 = vunpack.c.l.bf16 %v562
        %v1071 = vunpack.c.h.bf16 %v562
        %v1072 = vunpack.c.l.bf16 %v563
        %v1073 = vunpack.c.h.bf16 %v563
        %v1074 = vunpack.c.l.bf16 %v564
        %v1075 = vunpack.c.h.bf16 %v564
        %v1076 = vunpack.c.l.bf16 %v565
        %v1077 = vunpack.c.h.bf16 %v565
        %1078 = vmatprep.subr.mxu0 %v627
        %1079 = vmatpush1.msra.mxu0 %v626
        %1080 = vmatprep.subr.mxu0 %v623
        %1081 = vmatpush1.msra.mxu0 %v622
        %1082 = vmatprep.subr.mxu0 %v619
        %1083 = vmatpush1.msra.mxu0 %v618
        %1084 = vmatprep.subr.mxu0 %v615
        %1085 = vmatpush1.msra.mxu0 %v614
        %1086 = vmatprep.subr.mxu0 %v611
        %1087 = vmatpush1.msra.mxu0 %v610
        %1088 = vmatprep.subr.mxu0 %v607
        %1089 = vmatpush1.msra.mxu0 %v606
        %1090 = vmatprep.subr.mxu0 %v603
        %1091 = vmatpush1.msra.mxu0 %v602
        %1092 = vmatprep.subr.mxu0 %v599
        %1093 = vmatpush1.msra.mxu0 %v598
        %1094 = vmatprep.subr.mxu0 %v595
        %1095 = vmatpush1.msra.mxu0 %v594
        %1096 = vmatprep.subr.mxu0 %v591
        %1097 = vmatpush1.msra.mxu0 %v590
        %1098 = vmatprep.subr.mxu0 %v587
        %1099 = vmatpush1.msra.mxu0 %v586
        %1100 = vmatprep.subr.mxu0 %v583
        %1101 = vmatpush1.msra.mxu0 %v582
        %1102 = vmatprep.subr.mxu0 %v579
        %1103 = vmatpush1.msra.mxu0 %v578
        %1104 = vmatprep.subr.mxu0 %v575
        %1105 = vmatpush1.msra.mxu0 %v574
        %1106 = vmatprep.subr.mxu0 %v571
        %1107 = vmatpush1.msra.mxu0 %v570
        %1108 = vmatprep.subr.mxu0 %v567
        %1109 = vmatpush1.msra.mxu0 %v566
        %1110 = vmatprep.subr.mxu0 %v691
        %1111 = vmatpush2.msra.mxu0 %v690
        %1112 = vmatprep.subr.mxu0 %v687
        %1113 = vmatpush2.msra.mxu0 %v686
        %1114 = vmatprep.subr.mxu0 %v683
        %1115 = vmatpush2.msra.mxu0 %v682
        %1116 = vmatprep.subr.mxu0 %v679
        %1117 = vmatpush2.msra.mxu0 %v678
        %1118 = vmatprep.subr.mxu0 %v675
        %1119 = vmatpush2.msra.mxu0 %v674
        %1120 = vmatprep.subr.mxu0 %v671
        %1121 = vmatpush2.msra.mxu0 %v670
        %1122 = vmatprep.subr.mxu0 %v667
        %1123 = vmatpush2.msra.mxu0 %v666
        %1124 = vmatprep.subr.mxu0 %v663
        %1125 = vmatpush2.msra.mxu0 %v662
        %1126 = vmatprep.subr.mxu0 %v659
        %1127 = vmatpush2.msra.mxu0 %v658
        %1128 = vmatprep.subr.mxu0 %v655
        %1129 = vmatpush2.msra.mxu0 %v654
        %1130 = vmatprep.subr.mxu0 %v651
        %1131 = vmatpush2.msra.mxu0 %v650
        %1132 = vmatprep.subr.mxu0 %v647
        %1133 = vmatpush2.msra.mxu0 %v646
        %1134 = vmatprep.subr.mxu0 %v643
        %1135 = vmatpush2.msra.mxu0 %v642
        %1136 = vmatprep.subr.mxu0 %v639
        %1137 = vmatpush2.msra.mxu0 %v638
        %1138 = vmatprep.subr.mxu0 %v635
        %1139 = vmatpush2.msra.mxu0 %v634
        %1140 = vmatprep.subr.mxu0 %v631
        %1141 = vmatpush2.msra.mxu0 %v630
        %1142 = vmatprep.mubr.f32.mxu0 %v183
        %1143 = vmatmul.mubr.f32.gmra.mxu0 %v182
        %v1144 = vpop.f32.mrf.mxu0
        %v1145 = vadd.f32 0.0, %v1144
        %v1146 = vpop.f32.mrf.mxu0
        %v1147 = vadd.f32 0.0, %v1146
        %1148 = vmatprep.mubr.f32.mxu0 %v191
        %1149 = vmatmul.mubr.f32.gmra.mxu0 %v190
        %v1150 = vpop.f32.mrf.mxu0
        %v1151 = vadd.f32 0.0, %v1150
        %v1152 = vpop.f32.mrf.mxu0
        %v1153 = vadd.f32 0.0, %v1152
        %1154 = vmatprep.mubr.f32.mxu0 %v199
        %1155 = vmatmul.mubr.f32.gmra.mxu0 %v198
        %v1156 = vpop.f32.mrf.mxu0
        %v1157 = vadd.f32 0.0, %v1156
        %v1158 = vpop.f32.mrf.mxu0
        %v1159 = vadd.f32 0.0, %v1158
        %1160 = vmatprep.mubr.f32.mxu0 %v207
        %1161 = vmatmul.mubr.f32.gmra.mxu0 %v206
        %v1162 = vpop.f32.mrf.mxu0
        %v1163 = vadd.f32 0.0, %v1162
        %v1164 = vpop.f32.mrf.mxu0
        %v1165 = vadd.f32 0.0, %v1164
        %1166 = vmatprep.mubr.f32.mxu0 %v215
        %1167 = vmatmul.mubr.f32.gmra.mxu0 %v214
        %v1168 = vpop.f32.mrf.mxu0
        %v1169 = vadd.f32 0.0, %v1168
        %v1170 = vpop.f32.mrf.mxu0
        %v1171 = vadd.f32 0.0, %v1170
        %1172 = vmatprep.mubr.f32.mxu0 %v223
        %1173 = vmatmul.mubr.f32.gmra.mxu0 %v222
        %v1174 = vpop.f32.mrf.mxu0
        %v1175 = vadd.f32 0.0, %v1174
        %v1176 = vpop.f32.mrf.mxu0
        %v1177 = vadd.f32 0.0, %v1176
        %1178 = vmatprep.mubr.f32.mxu0 %v231
        %1179 = vmatmul.mubr.f32.gmra.mxu0 %v230
        %v1180 = vpop.f32.mrf.mxu0
        %v1181 = vadd.f32 0.0, %v1180
        %v1182 = vpop.f32.mrf.mxu0
        %v1183 = vadd.f32 0.0, %v1182
        %1184 = vmatprep.mubr.f32.mxu0 %v239
        %1185 = vmatmul.mubr.f32.gmra.mxu0 %v238
        %v1186 = vpop.f32.mrf.mxu0
        %v1187 = vadd.f32 0.0, %v1186
        %v1188 = vpop.f32.mrf.mxu0
        %v1189 = vadd.f32 0.0, %v1188
        %1190 = vmatprep.mubr.f32.mxu0 %v247
        %1191 = vmatmul.mubr.f32.gmra.mxu0 %v246
        %v1192 = vpop.f32.mrf.mxu0
        %v1193 = vadd.f32 0.0, %v1192
        %v1194 = vpop.f32.mrf.mxu0
        %v1195 = vadd.f32 0.0, %v1194
        %1196 = vmatprep.mubr.f32.mxu0 %v255
        %1197 = vmatmul.mubr.f32.gmra.mxu0 %v254
        %v1198 = vpop.f32.mrf.mxu0
        %v1199 = vadd.f32 0.0, %v1198
        %v1200 = vpop.f32.mrf.mxu0
        %v1201 = vadd.f32 0.0, %v1200
        %1202 = vmatprep.mubr.f32.mxu0 %v263
        %1203 = vmatmul.mubr.f32.gmra.mxu0 %v262
        %v1204 = vpop.f32.mrf.mxu0
        %v1205 = vadd.f32 0.0, %v1204
        %v1206 = vpop.f32.mrf.mxu0
        %v1207 = vadd.f32 0.0, %v1206
        %1208 = vmatprep.mubr.f32.mxu0 %v271
        %1209 = vmatmul.mubr.f32.gmra.mxu0 %v270
        %v1210 = vpop.f32.mrf.mxu0
        %v1211 = vadd.f32 0.0, %v1210
        %v1212 = vpop.f32.mrf.mxu0
        %v1213 = vadd.f32 0.0, %v1212
        %1214 = vmatprep.mubr.f32.mxu0 %v279
        %1215 = vmatmul.mubr.f32.gmra.mxu0 %v278
        %v1216 = vpop.f32.mrf.mxu0
        %v1217 = vadd.f32 0.0, %v1216
        %v1218 = vpop.f32.mrf.mxu0
        %v1219 = vadd.f32 0.0, %v1218
        %1220 = vmatprep.mubr.f32.mxu0 %v287
        %1221 = vmatmul.mubr.f32.gmra.mxu0 %v286
        %v1222 = vpop.f32.mrf.mxu0
        %v1223 = vadd.f32 0.0, %v1222
        %v1224 = vpop.f32.mrf.mxu0
        %v1225 = vadd.f32 0.0, %v1224
        %1226 = vmatprep.mubr.f32.mxu0 %v295
        %1227 = vmatmul.mubr.f32.gmra.mxu0 %v294
        %v1228 = vpop.f32.mrf.mxu0
        %v1229 = vadd.f32 0.0, %v1228
        %v1230 = vpop.f32.mrf.mxu0
        %v1231 = vadd.f32 0.0, %v1230
        %1232 = vmatprep.mubr.f32.mxu0 %v303
        %1233 = vmatmul.mubr.f32.gmra.mxu0 %v302
        %v1234 = vpop.f32.mrf.mxu0
        %v1235 = vadd.f32 0.0, %v1234
        %v1236 = vpop.f32.mrf.mxu0
        %v1237 = vadd.f32 0.0, %v1236
        %1238 = vdwg.mxu0
        %1239 = vmatprep.subr.mxu0 %v755
        %1240 = vmatpush1.msra.mxu0 %v754
        %1241 = vmatprep.subr.mxu0 %v751
        %1242 = vmatpush1.msra.mxu0 %v750
        %1243 = vmatprep.subr.mxu0 %v747
        %1244 = vmatpush1.msra.mxu0 %v746
        %1245 = vmatprep.subr.mxu0 %v743
        %1246 = vmatpush1.msra.mxu0 %v742
        %1247 = vmatprep.subr.mxu0 %v739
        %1248 = vmatpush1.msra.mxu0 %v738
        %1249 = vmatprep.subr.mxu0 %v735
        %1250 = vmatpush1.msra.mxu0 %v734
        %1251 = vmatprep.subr.mxu0 %v731
        %1252 = vmatpush1.msra.mxu0 %v730
        %1253 = vmatprep.subr.mxu0 %v727
        %1254 = vmatpush1.msra.mxu0 %v726
        %1255 = vmatprep.subr.mxu0 %v723
        %1256 = vmatpush1.msra.mxu0 %v722
        %1257 = vmatprep.subr.mxu0 %v719
        %1258 = vmatpush1.msra.mxu0 %v718
        %1259 = vmatprep.subr.mxu0 %v715
        %1260 = vmatpush1.msra.mxu0 %v714
        %1261 = vmatprep.subr.mxu0 %v711
        %1262 = vmatpush1.msra.mxu0 %v710
        %1263 = vmatprep.subr.mxu0 %v707
        %1264 = vmatpush1.msra.mxu0 %v706
        %1265 = vmatprep.subr.mxu0 %v703
        %1266 = vmatpush1.msra.mxu0 %v702
        %1267 = vmatprep.subr.mxu0 %v699
        %1268 = vmatpush1.msra.mxu0 %v698
        %1269 = vmatprep.subr.mxu0 %v695
        %1270 = vmatpush1.msra.mxu0 %v694
        %1271 = vmatprep.subr.mxu0 %v819
        %1272 = vmatpush2.msra.mxu0 %v818
        %1273 = vmatprep.subr.mxu0 %v815
        %1274 = vmatpush2.msra.mxu0 %v814
        %1275 = vmatprep.subr.mxu0 %v811
        %1276 = vmatpush2.msra.mxu0 %v810
        %1277 = vmatprep.subr.mxu0 %v807
        %1278 = vmatpush2.msra.mxu0 %v806
        %1279 = vmatprep.subr.mxu0 %v803
        %1280 = vmatpush2.msra.mxu0 %v802
        %1281 = vmatprep.subr.mxu0 %v799
        %1282 = vmatpush2.msra.mxu0 %v798
        %1283 = vmatprep.subr.mxu0 %v795
        %1284 = vmatpush2.msra.mxu0 %v794
        %1285 = vmatprep.subr.mxu0 %v791
        %1286 = vmatpush2.msra.mxu0 %v790
        %1287 = vmatprep.subr.mxu0 %v787
        %1288 = vmatpush2.msra.mxu0 %v786
        %1289 = vmatprep.subr.mxu0 %v783
        %1290 = vmatpush2.msra.mxu0 %v782
        %1291 = vmatprep.subr.mxu0 %v779
        %1292 = vmatpush2.msra.mxu0 %v778
        %1293 = vmatprep.subr.mxu0 %v775
        %1294 = vmatpush2.msra.mxu0 %v774
        %1295 = vmatprep.subr.mxu0 %v771
        %1296 = vmatpush2.msra.mxu0 %v770
        %1297 = vmatprep.subr.mxu0 %v767
        %1298 = vmatpush2.msra.mxu0 %v766
        %1299 = vmatprep.subr.mxu0 %v763
        %1300 = vmatpush2.msra.mxu0 %v762
        %1301 = vmatprep.subr.mxu0 %v759
        %1302 = vmatpush2.msra.mxu0 %v758
        %1303 = vmatprep.mubr.f32.mxu0 %v185
        %1304 = vmatmul.mubr.f32.gmra.mxu0 %v184
        %v1305 = vpop.f32.mrf.mxu0
        %v1306 = vadd.f32 %v1145, %v1305
        %v1307 = vpop.f32.mrf.mxu0
        %v1308 = vadd.f32 %v1147, %v1307
        %1309 = vmatprep.mubr.f32.mxu0 %v193
        %1310 = vmatmul.mubr.f32.gmra.mxu0 %v192
        %v1311 = vpop.f32.mrf.mxu0
        %v1312 = vadd.f32 %v1151, %v1311
        %v1313 = vpop.f32.mrf.mxu0
        %v1314 = vadd.f32 %v1153, %v1313
        %1315 = vmatprep.mubr.f32.mxu0 %v201
        %1316 = vmatmul.mubr.f32.gmra.mxu0 %v200
        %v1317 = vpop.f32.mrf.mxu0
        %v1318 = vadd.f32 %v1157, %v1317
        %v1319 = vpop.f32.mrf.mxu0
        %v1320 = vadd.f32 %v1159, %v1319
        %1321 = vmatprep.mubr.f32.mxu0 %v209
        %1322 = vmatmul.mubr.f32.gmra.mxu0 %v208
        %v1323 = vpop.f32.mrf.mxu0
        %v1324 = vadd.f32 %v1163, %v1323
        %v1325 = vpop.f32.mrf.mxu0
        %v1326 = vadd.f32 %v1165, %v1325
        %1327 = vmatprep.mubr.f32.mxu0 %v217
        %1328 = vmatmul.mubr.f32.gmra.mxu0 %v216
        %v1329 = vpop.f32.mrf.mxu0
        %v1330 = vadd.f32 %v1169, %v1329
        %v1331 = vpop.f32.mrf.mxu0
        %v1332 = vadd.f32 %v1171, %v1331
        %1333 = vmatprep.mubr.f32.mxu0 %v225
        %1334 = vmatmul.mubr.f32.gmra.mxu0 %v224
        %v1335 = vpop.f32.mrf.mxu0
        %v1336 = vadd.f32 %v1175, %v1335
        %v1337 = vpop.f32.mrf.mxu0
        %v1338 = vadd.f32 %v1177, %v1337
        %1339 = vmatprep.mubr.f32.mxu0 %v233
        %1340 = vmatmul.mubr.f32.gmra.mxu0 %v232
        %v1341 = vpop.f32.mrf.mxu0
        %v1342 = vadd.f32 %v1181, %v1341
        %v1343 = vpop.f32.mrf.mxu0
        %v1344 = vadd.f32 %v1183, %v1343
        %1345 = vmatprep.mubr.f32.mxu0 %v241
        %1346 = vmatmul.mubr.f32.gmra.mxu0 %v240
        %v1347 = vpop.f32.mrf.mxu0
        %v1348 = vadd.f32 %v1187, %v1347
        %v1349 = vpop.f32.mrf.mxu0
        %v1350 = vadd.f32 %v1189, %v1349
        %1351 = vmatprep.mubr.f32.mxu0 %v249
        %1352 = vmatmul.mubr.f32.gmra.mxu0 %v248
        %v1353 = vpop.f32.mrf.mxu0
        %v1354 = vadd.f32 %v1193, %v1353
        %v1355 = vpop.f32.mrf.mxu0
        %v1356 = vadd.f32 %v1195, %v1355
        %1357 = vmatprep.mubr.f32.mxu0 %v257
        %1358 = vmatmul.mubr.f32.gmra.mxu0 %v256
        %v1359 = vpop.f32.mrf.mxu0
        %v1360 = vadd.f32 %v1199, %v1359
        %v1361 = vpop.f32.mrf.mxu0
        %v1362 = vadd.f32 %v1201, %v1361
        %1363 = vmatprep.mubr.f32.mxu0 %v265
        %1364 = vmatmul.mubr.f32.gmra.mxu0 %v264
        %v1365 = vpop.f32.mrf.mxu0
        %v1366 = vadd.f32 %v1205, %v1365
        %v1367 = vpop.f32.mrf.mxu0
        %v1368 = vadd.f32 %v1207, %v1367
        %1369 = vmatprep.mubr.f32.mxu0 %v273
        %1370 = vmatmul.mubr.f32.gmra.mxu0 %v272
        %v1371 = vpop.f32.mrf.mxu0
        %v1372 = vadd.f32 %v1211, %v1371
        %v1373 = vpop.f32.mrf.mxu0
        %v1374 = vadd.f32 %v1213, %v1373
        %1375 = vmatprep.mubr.f32.mxu0 %v281
        %1376 = vmatmul.mubr.f32.gmra.mxu0 %v280
        %v1377 = vpop.f32.mrf.mxu0
        %v1378 = vadd.f32 %v1217, %v1377
        %v1379 = vpop.f32.mrf.mxu0
        %v1380 = vadd.f32 %v1219, %v1379
        %1381 = vmatprep.mubr.f32.mxu0 %v289
        %1382 = vmatmul.mubr.f32.gmra.mxu0 %v288
        %v1383 = vpop.f32.mrf.mxu0
        %v1384 = vadd.f32 %v1223, %v1383
        %v1385 = vpop.f32.mrf.mxu0
        %v1386 = vadd.f32 %v1225, %v1385
        %1387 = vmatprep.mubr.f32.mxu0 %v297
        %1388 = vmatmul.mubr.f32.gmra.mxu0 %v296
        %v1389 = vpop.f32.mrf.mxu0
        %v1390 = vadd.f32 %v1229, %v1389
        %v1391 = vpop.f32.mrf.mxu0
        %v1392 = vadd.f32 %v1231, %v1391
        %1393 = vmatprep.mubr.f32.mxu0 %v305
        %1394 = vmatmul.mubr.f32.gmra.mxu0 %v304
        %v1395 = vpop.f32.mrf.mxu0
        %v1396 = vadd.f32 %v1235, %v1395
        %v1397 = vpop.f32.mrf.mxu0
        %v1398 = vadd.f32 %v1237, %v1397
        %1399 = vdwg.mxu0
        %1400 = vmatprep.subr.mxu0 %v883
        %1401 = vmatpush1.msra.mxu0 %v882
        %1402 = vmatprep.subr.mxu0 %v879
        %1403 = vmatpush1.msra.mxu0 %v878
        %1404 = vmatprep.subr.mxu0 %v875
        %1405 = vmatpush1.msra.mxu0 %v874
        %1406 = vmatprep.subr.mxu0 %v871
        %1407 = vmatpush1.msra.mxu0 %v870
        %1408 = vmatprep.subr.mxu0 %v867
        %1409 = vmatpush1.msra.mxu0 %v866
        %1410 = vmatprep.subr.mxu0 %v863
        %1411 = vmatpush1.msra.mxu0 %v862
        %1412 = vmatprep.subr.mxu0 %v859
        %1413 = vmatpush1.msra.mxu0 %v858
        %1414 = vmatprep.subr.mxu0 %v855
        %1415 = vmatpush1.msra.mxu0 %v854
        %1416 = vmatprep.subr.mxu0 %v851
        %1417 = vmatpush1.msra.mxu0 %v850
        %1418 = vmatprep.subr.mxu0 %v847
        %1419 = vmatpush1.msra.mxu0 %v846
        %1420 = vmatprep.subr.mxu0 %v843
        %1421 = vmatpush1.msra.mxu0 %v842
        %1422 = vmatprep.subr.mxu0 %v839
        %1423 = vmatpush1.msra.mxu0 %v838
        %1424 = vmatprep.subr.mxu0 %v835
        %1425 = vmatpush1.msra.mxu0 %v834
        %1426 = vmatprep.subr.mxu0 %v831
        %1427 = vmatpush1.msra.mxu0 %v830
        %1428 = vmatprep.subr.mxu0 %v827
        %1429 = vmatpush1.msra.mxu0 %v826
        %1430 = vmatprep.subr.mxu0 %v823
        %1431 = vmatpush1.msra.mxu0 %v822
        %1432 = vmatprep.subr.mxu0 %v947
        %1433 = vmatpush2.msra.mxu0 %v946
        %1434 = vmatprep.subr.mxu0 %v943
        %1435 = vmatpush2.msra.mxu0 %v942
        %1436 = vmatprep.subr.mxu0 %v939
        %1437 = vmatpush2.msra.mxu0 %v938
        %1438 = vmatprep.subr.mxu0 %v935
        %1439 = vmatpush2.msra.mxu0 %v934
        %1440 = vmatprep.subr.mxu0 %v931
        %1441 = vmatpush2.msra.mxu0 %v930
        %1442 = vmatprep.subr.mxu0 %v927
        %1443 = vmatpush2.msra.mxu0 %v926
        %1444 = vmatprep.subr.mxu0 %v923
        %1445 = vmatpush2.msra.mxu0 %v922
        %1446 = vmatprep.subr.mxu0 %v919
        %1447 = vmatpush2.msra.mxu0 %v918
        %1448 = vmatprep.subr.mxu0 %v915
        %1449 = vmatpush2.msra.mxu0 %v914
        %1450 = vmatprep.subr.mxu0 %v911
        %1451 = vmatpush2.msra.mxu0 %v910
        %1452 = vmatprep.subr.mxu0 %v907
        %1453 = vmatpush2.msra.mxu0 %v906
        %1454 = vmatprep.subr.mxu0 %v903
        %1455 = vmatpush2.msra.mxu0 %v902
        %1456 = vmatprep.subr.mxu0 %v899
        %1457 = vmatpush2.msra.mxu0 %v898
        %1458 = vmatprep.subr.mxu0 %v895
        %1459 = vmatpush2.msra.mxu0 %v894
        %1460 = vmatprep.subr.mxu0 %v891
        %1461 = vmatpush2.msra.mxu0 %v890
        %1462 = vmatprep.subr.mxu0 %v887
        %1463 = vmatpush2.msra.mxu0 %v886
        %1464 = vmatprep.mubr.f32.mxu0 %v187
        %1465 = vmatmul.mubr.f32.gmra.mxu0 %v186
        %v1466 = vpop.f32.mrf.mxu0
        %v1467 = vadd.f32 %v1306, %v1466
        %v1468 = vpop.f32.mrf.mxu0
        %v1469 = vadd.f32 %v1308, %v1468
        %1470 = vmatprep.mubr.f32.mxu0 %v195
        %1471 = vmatmul.mubr.f32.gmra.mxu0 %v194
        %v1472 = vpop.f32.mrf.mxu0
        %v1473 = vadd.f32 %v1312, %v1472
        %v1474 = vpop.f32.mrf.mxu0
        %v1475 = vadd.f32 %v1314, %v1474
        %1476 = vmatprep.mubr.f32.mxu0 %v203
        %1477 = vmatmul.mubr.f32.gmra.mxu0 %v202
        %v1478 = vpop.f32.mrf.mxu0
        %v1479 = vadd.f32 %v1318, %v1478
        %v1480 = vpop.f32.mrf.mxu0
        %v1481 = vadd.f32 %v1320, %v1480
        %1482 = vmatprep.mubr.f32.mxu0 %v211
        %1483 = vmatmul.mubr.f32.gmra.mxu0 %v210
        %v1484 = vpop.f32.mrf.mxu0
        %v1485 = vadd.f32 %v1324, %v1484
        %v1486 = vpop.f32.mrf.mxu0
        %v1487 = vadd.f32 %v1326, %v1486
        %1488 = vmatprep.mubr.f32.mxu0 %v219
        %1489 = vmatmul.mubr.f32.gmra.mxu0 %v218
        %v1490 = vpop.f32.mrf.mxu0
        %v1491 = vadd.f32 %v1330, %v1490
        %v1492 = vpop.f32.mrf.mxu0
        %v1493 = vadd.f32 %v1332, %v1492
        %1494 = vmatprep.mubr.f32.mxu0 %v227
        %1495 = vmatmul.mubr.f32.gmra.mxu0 %v226
        %v1496 = vpop.f32.mrf.mxu0
        %v1497 = vadd.f32 %v1336, %v1496
        %v1498 = vpop.f32.mrf.mxu0
        %v1499 = vadd.f32 %v1338, %v1498
        %1500 = vmatprep.mubr.f32.mxu0 %v235
        %1501 = vmatmul.mubr.f32.gmra.mxu0 %v234
        %v1502 = vpop.f32.mrf.mxu0
        %v1503 = vadd.f32 %v1342, %v1502
        %v1504 = vpop.f32.mrf.mxu0
        %v1505 = vadd.f32 %v1344, %v1504
        %1506 = vmatprep.mubr.f32.mxu0 %v243
        %1507 = vmatmul.mubr.f32.gmra.mxu0 %v242
        %v1508 = vpop.f32.mrf.mxu0
        %v1509 = vadd.f32 %v1348, %v1508
        %v1510 = vpop.f32.mrf.mxu0
        %v1511 = vadd.f32 %v1350, %v1510
        %1512 = vmatprep.mubr.f32.mxu0 %v251
        %1513 = vmatmul.mubr.f32.gmra.mxu0 %v250
        %v1514 = vpop.f32.mrf.mxu0
        %v1515 = vadd.f32 %v1354, %v1514
        %v1516 = vpop.f32.mrf.mxu0
        %v1517 = vadd.f32 %v1356, %v1516
        %1518 = vmatprep.mubr.f32.mxu0 %v259
        %1519 = vmatmul.mubr.f32.gmra.mxu0 %v258
        %v1520 = vpop.f32.mrf.mxu0
        %v1521 = vadd.f32 %v1360, %v1520
        %v1522 = vpop.f32.mrf.mxu0
        %v1523 = vadd.f32 %v1362, %v1522
        %1524 = vmatprep.mubr.f32.mxu0 %v267
        %1525 = vmatmul.mubr.f32.gmra.mxu0 %v266
        %v1526 = vpop.f32.mrf.mxu0
        %v1527 = vadd.f32 %v1366, %v1526
        %v1528 = vpop.f32.mrf.mxu0
        %v1529 = vadd.f32 %v1368, %v1528
        %1530 = vmatprep.mubr.f32.mxu0 %v275
        %1531 = vmatmul.mubr.f32.gmra.mxu0 %v274
        %v1532 = vpop.f32.mrf.mxu0
        %v1533 = vadd.f32 %v1372, %v1532
        %v1534 = vpop.f32.mrf.mxu0
        %v1535 = vadd.f32 %v1374, %v1534
        %1536 = vmatprep.mubr.f32.mxu0 %v283
        %1537 = vmatmul.mubr.f32.gmra.mxu0 %v282
        %v1538 = vpop.f32.mrf.mxu0
        %v1539 = vadd.f32 %v1378, %v1538
        %v1540 = vpop.f32.mrf.mxu0
        %v1541 = vadd.f32 %v1380, %v1540
        %1542 = vmatprep.mubr.f32.mxu0 %v291
        %1543 = vmatmul.mubr.f32.gmra.mxu0 %v290
        %v1544 = vpop.f32.mrf.mxu0
        %v1545 = vadd.f32 %v1384, %v1544
        %v1546 = vpop.f32.mrf.mxu0
        %v1547 = vadd.f32 %v1386, %v1546
        %1548 = vmatprep.mubr.f32.mxu0 %v299
        %1549 = vmatmul.mubr.f32.gmra.mxu0 %v298
        %v1550 = vpop.f32.mrf.mxu0
        %v1551 = vadd.f32 %v1390, %v1550
        %v1552 = vpop.f32.mrf.mxu0
        %v1553 = vadd.f32 %v1392, %v1552
        %1554 = vmatprep.mubr.f32.mxu0 %v307
        %1555 = vmatmul.mubr.f32.gmra.mxu0 %v306
        %v1556 = vpop.f32.mrf.mxu0
        %v1557 = vadd.f32 %v1396, %v1556
        %v1558 = vpop.f32.mrf.mxu0
        %v1559 = vadd.f32 %v1398, %v1558
        %1560 = vdwg.mxu0
        %1561 = vmatprep.subr.mxu0 %v1011
        %1562 = vmatpush1.msra.mxu0 %v1010
        %1563 = vmatprep.subr.mxu0 %v1007
        %1564 = vmatpush1.msra.mxu0 %v1006
        %1565 = vmatprep.subr.mxu0 %v1003
        %1566 = vmatpush1.msra.mxu0 %v1002
        %1567 = vmatprep.subr.mxu0 %v999
        %1568 = vmatpush1.msra.mxu0 %v998
        %1569 = vmatprep.subr.mxu0 %v995
        %1570 = vmatpush1.msra.mxu0 %v994
        %1571 = vmatprep.subr.mxu0 %v991
        %1572 = vmatpush1.msra.mxu0 %v990
        %1573 = vmatprep.subr.mxu0 %v987
        %1574 = vmatpush1.msra.mxu0 %v986
        %1575 = vmatprep.subr.mxu0 %v983
        %1576 = vmatpush1.msra.mxu0 %v982
        %1577 = vmatprep.subr.mxu0 %v979
        %1578 = vmatpush1.msra.mxu0 %v978
        %1579 = vmatprep.subr.mxu0 %v975
        %1580 = vmatpush1.msra.mxu0 %v974
        %1581 = vmatprep.subr.mxu0 %v971
        %1582 = vmatpush1.msra.mxu0 %v970
        %1583 = vmatprep.subr.mxu0 %v967
        %1584 = vmatpush1.msra.mxu0 %v966
        %1585 = vmatprep.subr.mxu0 %v963
        %1586 = vmatpush1.msra.mxu0 %v962
        %1587 = vmatprep.subr.mxu0 %v959
        %1588 = vmatpush1.msra.mxu0 %v958
        %1589 = vmatprep.subr.mxu0 %v955
        %1590 = vmatpush1.msra.mxu0 %v954
        %1591 = vmatprep.subr.mxu0 %v951
        %1592 = vmatpush1.msra.mxu0 %v950
        %1593 = vmatprep.subr.mxu0 %v1075
        %1594 = vmatpush2.msra.mxu0 %v1074
        %1595 = vmatprep.subr.mxu0 %v1071
        %1596 = vmatpush2.msra.mxu0 %v1070
        %1597 = vmatprep.subr.mxu0 %v1067
        %1598 = vmatpush2.msra.mxu0 %v1066
        %1599 = vmatprep.subr.mxu0 %v1063
        %1600 = vmatpush2.msra.mxu0 %v1062
        %1601 = vmatprep.subr.mxu0 %v1059
        %1602 = vmatpush2.msra.mxu0 %v1058
        %1603 = vmatprep.subr.mxu0 %v1055
        %1604 = vmatpush2.msra.mxu0 %v1054
        %1605 = vmatprep.subr.mxu0 %v1051
        %1606 = vmatpush2.msra.mxu0 %v1050
        %1607 = vmatprep.subr.mxu0 %v1047
        %1608 = vmatpush2.msra.mxu0 %v1046
        %1609 = vmatprep.subr.mxu0 %v1043
        %1610 = vmatpush2.msra.mxu0 %v1042
        %1611 = vmatprep.subr.mxu0 %v1039
        %1612 = vmatpush2.msra.mxu0 %v1038
        %1613 = vmatprep.subr.mxu0 %v1035
        %1614 = vmatpush2.msra.mxu0 %v1034
        %1615 = vmatprep.subr.mxu0 %v1031
        %1616 = vmatpush2.msra.mxu0 %v1030
        %1617 = vmatprep.subr.mxu0 %v1027
        %1618 = vmatpush2.msra.mxu0 %v1026
        %1619 = vmatprep.subr.mxu0 %v1023
        %1620 = vmatpush2.msra.mxu0 %v1022
        %1621 = vmatprep.subr.mxu0 %v1019
        %1622 = vmatpush2.msra.mxu0 %v1018
        %1623 = vmatprep.subr.mxu0 %v1015
        %1624 = vmatpush2.msra.mxu0 %v1014
        %1625 = vmatprep.mubr.f32.mxu0 %v189
        %1626 = vmatmul.mubr.f32.gmra.mxu0 %v188
        %v1627 = vpop.f32.mrf.mxu0
        %v1628 = vadd.f32 %v1467, %v1627
        %v1629 = vpop.f32.mrf.mxu0
        %v1630 = vadd.f32 %v1469, %v1629
        %1631 = vmatprep.mubr.f32.mxu0 %v197
        %1632 = vmatmul.mubr.f32.gmra.mxu0 %v196
        %v1633 = vpop.f32.mrf.mxu0
        %v1634 = vadd.f32 %v1473, %v1633
        %v1635 = vpop.f32.mrf.mxu0
        %v1636 = vadd.f32 %v1475, %v1635
        %1637 = vmatprep.mubr.f32.mxu0 %v205
        %1638 = vmatmul.mubr.f32.gmra.mxu0 %v204
        %v1639 = vpop.f32.mrf.mxu0
        %v1640 = vadd.f32 %v1479, %v1639
        %v1641 = vpop.f32.mrf.mxu0
        %v1642 = vadd.f32 %v1481, %v1641
        %1643 = vmatprep.mubr.f32.mxu0 %v213
        %1644 = vmatmul.mubr.f32.gmra.mxu0 %v212
        %v1645 = vpop.f32.mrf.mxu0
        %v1646 = vadd.f32 %v1485, %v1645
        %v1647 = vpop.f32.mrf.mxu0
        %v1648 = vadd.f32 %v1487, %v1647
        %1649 = vmatprep.mubr.f32.mxu0 %v221
        %1650 = vmatmul.mubr.f32.gmra.mxu0 %v220
        %v1651 = vpop.f32.mrf.mxu0
        %v1652 = vadd.f32 %v1491, %v1651
        %v1653 = vpop.f32.mrf.mxu0
        %v1654 = vadd.f32 %v1493, %v1653
        %1655 = vmatprep.mubr.f32.mxu0 %v229
        %1656 = vmatmul.mubr.f32.gmra.mxu0 %v228
        %v1657 = vpop.f32.mrf.mxu0
        %v1658 = vadd.f32 %v1497, %v1657
        %v1659 = vpop.f32.mrf.mxu0
        %v1660 = vadd.f32 %v1499, %v1659
        %1661 = vmatprep.mubr.f32.mxu0 %v237
        %1662 = vmatmul.mubr.f32.gmra.mxu0 %v236
        %v1663 = vpop.f32.mrf.mxu0
        %v1664 = vadd.f32 %v1503, %v1663
        %v1665 = vpop.f32.mrf.mxu0
        %v1666 = vadd.f32 %v1505, %v1665
        %1667 = vmatprep.mubr.f32.mxu0 %v245
        %1668 = vmatmul.mubr.f32.gmra.mxu0 %v244
        %v1669 = vpop.f32.mrf.mxu0
        %v1670 = vadd.f32 %v1509, %v1669
        %v1671 = vpop.f32.mrf.mxu0
        %v1672 = vadd.f32 %v1511, %v1671
        %1673 = vmatprep.mubr.f32.mxu0 %v253
        %1674 = vmatmul.mubr.f32.gmra.mxu0 %v252
        %v1675 = vpop.f32.mrf.mxu0
        %v1676 = vadd.f32 %v1515, %v1675
        %v1677 = vpop.f32.mrf.mxu0
        %v1678 = vadd.f32 %v1517, %v1677
        %1679 = vmatprep.mubr.f32.mxu0 %v261
        %1680 = vmatmul.mubr.f32.gmra.mxu0 %v260
        %v1681 = vpop.f32.mrf.mxu0
        %v1682 = vadd.f32 %v1521, %v1681
        %v1683 = vpop.f32.mrf.mxu0
        %v1684 = vadd.f32 %v1523, %v1683
        %1685 = vmatprep.mubr.f32.mxu0 %v269
        %1686 = vmatmul.mubr.f32.gmra.mxu0 %v268
        %v1687 = vpop.f32.mrf.mxu0
        %v1688 = vadd.f32 %v1527, %v1687
        %v1689 = vpop.f32.mrf.mxu0
        %v1690 = vadd.f32 %v1529, %v1689
        %1691 = vmatprep.mubr.f32.mxu0 %v277
        %1692 = vmatmul.mubr.f32.gmra.mxu0 %v276
        %v1693 = vpop.f32.mrf.mxu0
        %v1694 = vadd.f32 %v1533, %v1693
        %v1695 = vpop.f32.mrf.mxu0
        %v1696 = vadd.f32 %v1535, %v1695
        %1697 = vmatprep.mubr.f32.mxu0 %v285
        %1698 = vmatmul.mubr.f32.gmra.mxu0 %v284
        %v1699 = vpop.f32.mrf.mxu0
        %v1700 = vadd.f32 %v1539, %v1699
        %v1701 = vpop.f32.mrf.mxu0
        %v1702 = vadd.f32 %v1541, %v1701
        %1703 = vmatprep.mubr.f32.mxu0 %v293
        %1704 = vmatmul.mubr.f32.gmra.mxu0 %v292
        %v1705 = vpop.f32.mrf.mxu0
        %v1706 = vadd.f32 %v1545, %v1705
        %v1707 = vpop.f32.mrf.mxu0
        %v1708 = vadd.f32 %v1547, %v1707
        %1709 = vmatprep.mubr.f32.mxu0 %v301
        %1710 = vmatmul.mubr.f32.gmra.mxu0 %v300
        %v1711 = vpop.f32.mrf.mxu0
        %v1712 = vadd.f32 %v1551, %v1711
        %v1713 = vpop.f32.mrf.mxu0
        %v1714 = vadd.f32 %v1553, %v1713
        %1715 = vmatprep.mubr.f32.mxu0 %v309
        %1716 = vmatmul.mubr.f32.gmra.mxu0 %v308
        %v1717 = vpop.f32.mrf.mxu0
        %v1718 = vadd.f32 %v1557, %v1717
        %v1719 = vpop.f32.mrf.mxu0
        %v1720 = vadd.f32 %v1559, %v1719
        %1721 = vdwg.mxu0
        %1722 = vmatprep.subr.mxu0 %v629
        %1723 = vmatpush1.msra.mxu0 %v628
        %1724 = vmatprep.subr.mxu0 %v625
        %1725 = vmatpush1.msra.mxu0 %v624
        %1726 = vmatprep.subr.mxu0 %v621
        %1727 = vmatpush1.msra.mxu0 %v620
        %1728 = vmatprep.subr.mxu0 %v617
        %1729 = vmatpush1.msra.mxu0 %v616
        %1730 = vmatprep.subr.mxu0 %v613
        %1731 = vmatpush1.msra.mxu0 %v612
        %1732 = vmatprep.subr.mxu0 %v609
        %1733 = vmatpush1.msra.mxu0 %v608
        %1734 = vmatprep.subr.mxu0 %v605
        %1735 = vmatpush1.msra.mxu0 %v604
        %1736 = vmatprep.subr.mxu0 %v601
        %1737 = vmatpush1.msra.mxu0 %v600
        %1738 = vmatprep.subr.mxu0 %v597
        %1739 = vmatpush1.msra.mxu0 %v596
        %1740 = vmatprep.subr.mxu0 %v593
        %1741 = vmatpush1.msra.mxu0 %v592
        %1742 = vmatprep.subr.mxu0 %v589
        %1743 = vmatpush1.msra.mxu0 %v588
        %1744 = vmatprep.subr.mxu0 %v585
        %1745 = vmatpush1.msra.mxu0 %v584
        %1746 = vmatprep.subr.mxu0 %v581
        %1747 = vmatpush1.msra.mxu0 %v580
        %1748 = vmatprep.subr.mxu0 %v577
        %1749 = vmatpush1.msra.mxu0 %v576
        %1750 = vmatprep.subr.mxu0 %v573
        %1751 = vmatpush1.msra.mxu0 %v572
        %1752 = vmatprep.subr.mxu0 %v569
        %1753 = vmatpush1.msra.mxu0 %v568
        %1754 = vmatprep.subr.mxu0 %v693
        %1755 = vmatpush2.msra.mxu0 %v692
        %1756 = vmatprep.subr.mxu0 %v689
        %1757 = vmatpush2.msra.mxu0 %v688
        %1758 = vmatprep.subr.mxu0 %v685
        %1759 = vmatpush2.msra.mxu0 %v684
        %1760 = vmatprep.subr.mxu0 %v681
        %1761 = vmatpush2.msra.mxu0 %v680
        %1762 = vmatprep.subr.mxu0 %v677
        %1763 = vmatpush2.msra.mxu0 %v676
        %1764 = vmatprep.subr.mxu0 %v673
        %1765 = vmatpush2.msra.mxu0 %v672
        %1766 = vmatprep.subr.mxu0 %v669
        %1767 = vmatpush2.msra.mxu0 %v668
        %1768 = vmatprep.subr.mxu0 %v665
        %1769 = vmatpush2.msra.mxu0 %v664
        %1770 = vmatprep.subr.mxu0 %v661
        %1771 = vmatpush2.msra.mxu0 %v660
        %1772 = vmatprep.subr.mxu0 %v657
        %1773 = vmatpush2.msra.mxu0 %v656
        %1774 = vmatprep.subr.mxu0 %v653
        %1775 = vmatpush2.msra.mxu0 %v652
        %1776 = vmatprep.subr.mxu0 %v649
        %1777 = vmatpush2.msra.mxu0 %v648
        %1778 = vmatprep.subr.mxu0 %v645
        %1779 = vmatpush2.msra.mxu0 %v644
        %1780 = vmatprep.subr.mxu0 %v641
        %1781 = vmatpush2.msra.mxu0 %v640
        %1782 = vmatprep.subr.mxu0 %v637
        %1783 = vmatpush2.msra.mxu0 %v636
        %1784 = vmatprep.subr.mxu0 %v633
        %1785 = vmatpush2.msra.mxu0 %v632
        %1786 = vmatprep.mubr.f32.mxu0 %v183
        %1787 = vmatmul.mubr.f32.gmra.mxu0 %v182
        %v1788 = vpop.f32.mrf.mxu0
        %v1789 = vadd.f32 0.0, %v1788
        %v1790 = vpop.f32.mrf.mxu0
        %v1791 = vadd.f32 0.0, %v1790
        %1792 = vmatprep.mubr.f32.mxu0 %v191
        %1793 = vmatmul.mubr.f32.gmra.mxu0 %v190
        %v1794 = vpop.f32.mrf.mxu0
        %v1795 = vadd.f32 0.0, %v1794
        %v1796 = vpop.f32.mrf.mxu0
        %v1797 = vadd.f32 0.0, %v1796
        %1798 = vmatprep.mubr.f32.mxu0 %v199
        %1799 = vmatmul.mubr.f32.gmra.mxu0 %v198
        %v1800 = vpop.f32.mrf.mxu0
        %v1801 = vadd.f32 0.0, %v1800
        %v1802 = vpop.f32.mrf.mxu0
        %v1803 = vadd.f32 0.0, %v1802
        %1804 = vmatprep.mubr.f32.mxu0 %v207
        %1805 = vmatmul.mubr.f32.gmra.mxu0 %v206
        %v1806 = vpop.f32.mrf.mxu0
        %v1807 = vadd.f32 0.0, %v1806
        %v1808 = vpop.f32.mrf.mxu0
        %v1809 = vadd.f32 0.0, %v1808
        %1810 = vmatprep.mubr.f32.mxu0 %v215
        %1811 = vmatmul.mubr.f32.gmra.mxu0 %v214
        %v1812 = vpop.f32.mrf.mxu0
        %v1813 = vadd.f32 0.0, %v1812
        %v1814 = vpop.f32.mrf.mxu0
        %v1815 = vadd.f32 0.0, %v1814
        %1816 = vmatprep.mubr.f32.mxu0 %v223
        %1817 = vmatmul.mubr.f32.gmra.mxu0 %v222
        %v1818 = vpop.f32.mrf.mxu0
        %v1819 = vadd.f32 0.0, %v1818
        %v1820 = vpop.f32.mrf.mxu0
        %v1821 = vadd.f32 0.0, %v1820
        %1822 = vmatprep.mubr.f32.mxu0 %v231
        %1823 = vmatmul.mubr.f32.gmra.mxu0 %v230
        %v1824 = vpop.f32.mrf.mxu0
        %v1825 = vadd.f32 0.0, %v1824
        %v1826 = vpop.f32.mrf.mxu0
        %v1827 = vadd.f32 0.0, %v1826
        %1828 = vmatprep.mubr.f32.mxu0 %v239
        %1829 = vmatmul.mubr.f32.gmra.mxu0 %v238
        %v1830 = vpop.f32.mrf.mxu0
        %v1831 = vadd.f32 0.0, %v1830
        %v1832 = vpop.f32.mrf.mxu0
        %v1833 = vadd.f32 0.0, %v1832
        %1834 = vmatprep.mubr.f32.mxu0 %v247
        %1835 = vmatmul.mubr.f32.gmra.mxu0 %v246
        %v1836 = vpop.f32.mrf.mxu0
        %v1837 = vadd.f32 0.0, %v1836
        %v1838 = vpop.f32.mrf.mxu0
        %v1839 = vadd.f32 0.0, %v1838
        %1840 = vmatprep.mubr.f32.mxu0 %v255
        %1841 = vmatmul.mubr.f32.gmra.mxu0 %v254
        %v1842 = vpop.f32.mrf.mxu0
        %v1843 = vadd.f32 0.0, %v1842
        %v1844 = vpop.f32.mrf.mxu0
        %v1845 = vadd.f32 0.0, %v1844
        %1846 = vmatprep.mubr.f32.mxu0 %v263
        %1847 = vmatmul.mubr.f32.gmra.mxu0 %v262
        %v1848 = vpop.f32.mrf.mxu0
        %v1849 = vadd.f32 0.0, %v1848
        %v1850 = vpop.f32.mrf.mxu0
        %v1851 = vadd.f32 0.0, %v1850
        %1852 = vmatprep.mubr.f32.mxu0 %v271
        %1853 = vmatmul.mubr.f32.gmra.mxu0 %v270
        %v1854 = vpop.f32.mrf.mxu0
        %v1855 = vadd.f32 0.0, %v1854
        %v1856 = vpop.f32.mrf.mxu0
        %v1857 = vadd.f32 0.0, %v1856
        %1858 = vmatprep.mubr.f32.mxu0 %v279
        %1859 = vmatmul.mubr.f32.gmra.mxu0 %v278
        %v1860 = vpop.f32.mrf.mxu0
        %v1861 = vadd.f32 0.0, %v1860
        %v1862 = vpop.f32.mrf.mxu0
        %v1863 = vadd.f32 0.0, %v1862
        %1864 = vmatprep.mubr.f32.mxu0 %v287
        %1865 = vmatmul.mubr.f32.gmra.mxu0 %v286
        %v1866 = vpop.f32.mrf.mxu0
        %v1867 = vadd.f32 0.0, %v1866
        %v1868 = vpop.f32.mrf.mxu0
        %v1869 = vadd.f32 0.0, %v1868
        %1870 = vmatprep.mubr.f32.mxu0 %v295
        %1871 = vmatmul.mubr.f32.gmra.mxu0 %v294
        %v1872 = vpop.f32.mrf.mxu0
        %v1873 = vadd.f32 0.0, %v1872
        %v1874 = vpop.f32.mrf.mxu0
        %v1875 = vadd.f32 0.0, %v1874
        %1876 = vmatprep.mubr.f32.mxu0 %v303
        %1877 = vmatmul.mubr.f32.gmra.mxu0 %v302
        %v1878 = vpop.f32.mrf.mxu0
        %v1879 = vadd.f32 0.0, %v1878
        %v1880 = vpop.f32.mrf.mxu0
        %v1881 = vadd.f32 0.0, %v1880
        %1882 = vdwg.mxu0
        %1883 = vmatprep.subr.mxu0 %v757
        %1884 = vmatpush1.msra.mxu0 %v756
        %1885 = vmatprep.subr.mxu0 %v753
        %1886 = vmatpush1.msra.mxu0 %v752
        %1887 = vmatprep.subr.mxu0 %v749
        %1888 = vmatpush1.msra.mxu0 %v748
        %1889 = vmatprep.subr.mxu0 %v745
        %1890 = vmatpush1.msra.mxu0 %v744
        %1891 = vmatprep.subr.mxu0 %v741
        %1892 = vmatpush1.msra.mxu0 %v740
        %1893 = vmatprep.subr.mxu0 %v737
        %1894 = vmatpush1.msra.mxu0 %v736
        %1895 = vmatprep.subr.mxu0 %v733
        %1896 = vmatpush1.msra.mxu0 %v732
        %1897 = vmatprep.subr.mxu0 %v729
        %1898 = vmatpush1.msra.mxu0 %v728
        %1899 = vmatprep.subr.mxu0 %v725
        %1900 = vmatpush1.msra.mxu0 %v724
        %1901 = vmatprep.subr.mxu0 %v721
        %1902 = vmatpush1.msra.mxu0 %v720
        %1903 = vmatprep.subr.mxu0 %v717
        %1904 = vmatpush1.msra.mxu0 %v716
        %1905 = vmatprep.subr.mxu0 %v713
        %1906 = vmatpush1.msra.mxu0 %v712
        %1907 = vmatprep.subr.mxu0 %v709
        %1908 = vmatpush1.msra.mxu0 %v708
        %1909 = vmatprep.subr.mxu0 %v705
        %1910 = vmatpush1.msra.mxu0 %v704
        %1911 = vmatprep.subr.mxu0 %v701
        %1912 = vmatpush1.msra.mxu0 %v700
        %1913 = vmatprep.subr.mxu0 %v697
        %1914 = vmatpush1.msra.mxu0 %v696
        %1915 = vmatprep.subr.mxu0 %v821
        %1916 = vmatpush2.msra.mxu0 %v820
        %1917 = vmatprep.subr.mxu0 %v817
        %1918 = vmatpush2.msra.mxu0 %v816
        %1919 = vmatprep.subr.mxu0 %v813
        %1920 = vmatpush2.msra.mxu0 %v812
        %1921 = vmatprep.subr.mxu0 %v809
        %1922 = vmatpush2.msra.mxu0 %v808
        %1923 = vmatprep.subr.mxu0 %v805
        %1924 = vmatpush2.msra.mxu0 %v804
        %1925 = vmatprep.subr.mxu0 %v801
        %1926 = vmatpush2.msra.mxu0 %v800
        %1927 = vmatprep.subr.mxu0 %v797
        %1928 = vmatpush2.msra.mxu0 %v796
        %1929 = vmatprep.subr.mxu0 %v793
        %1930 = vmatpush2.msra.mxu0 %v792
        %1931 = vmatprep.subr.mxu0 %v789
        %1932 = vmatpush2.msra.mxu0 %v788
        %1933 = vmatprep.subr.mxu0 %v785
        %1934 = vmatpush2.msra.mxu0 %v784
        %1935 = vmatprep.subr.mxu0 %v781
        %1936 = vmatpush2.msra.mxu0 %v780
        %1937 = vmatprep.subr.mxu0 %v777
        %1938 = vmatpush2.msra.mxu0 %v776
        %1939 = vmatprep.subr.mxu0 %v773
        %1940 = vmatpush2.msra.mxu0 %v772
        %1941 = vmatprep.subr.mxu0 %v769
        %1942 = vmatpush2.msra.mxu0 %v768
        %1943 = vmatprep.subr.mxu0 %v765
        %1944 = vmatpush2.msra.mxu0 %v764
        %1945 = vmatprep.subr.mxu0 %v761
        %1946 = vmatpush2.msra.mxu0 %v760
        %1947 = vmatprep.mubr.f32.mxu0 %v185
        %1948 = vmatmul.mubr.f32.gmra.mxu0 %v184
        %v1949 = vpop.f32.mrf.mxu0
        %v1950 = vadd.f32 %v1789, %v1949
        %v1951 = vpop.f32.mrf.mxu0
        %v1952 = vadd.f32 %v1791, %v1951
        %1953 = vmatprep.mubr.f32.mxu0 %v193
        %1954 = vmatmul.mubr.f32.gmra.mxu0 %v192
        %v1955 = vpop.f32.mrf.mxu0
        %v1956 = vadd.f32 %v1795, %v1955
        %v1957 = vpop.f32.mrf.mxu0
        %v1958 = vadd.f32 %v1797, %v1957
        %1959 = vmatprep.mubr.f32.mxu0 %v201
        %1960 = vmatmul.mubr.f32.gmra.mxu0 %v200
        %v1961 = vpop.f32.mrf.mxu0
        %v1962 = vadd.f32 %v1801, %v1961
        %v1963 = vpop.f32.mrf.mxu0
        %v1964 = vadd.f32 %v1803, %v1963
        %1965 = vmatprep.mubr.f32.mxu0 %v209
        %1966 = vmatmul.mubr.f32.gmra.mxu0 %v208
        %v1967 = vpop.f32.mrf.mxu0
        %v1968 = vadd.f32 %v1807, %v1967
        %v1969 = vpop.f32.mrf.mxu0
        %v1970 = vadd.f32 %v1809, %v1969
        %1971 = vmatprep.mubr.f32.mxu0 %v217
        %1972 = vmatmul.mubr.f32.gmra.mxu0 %v216
        %v1973 = vpop.f32.mrf.mxu0
        %v1974 = vadd.f32 %v1813, %v1973
        %v1975 = vpop.f32.mrf.mxu0
        %v1976 = vadd.f32 %v1815, %v1975
        %1977 = vmatprep.mubr.f32.mxu0 %v225
        %1978 = vmatmul.mubr.f32.gmra.mxu0 %v224
        %v1979 = vpop.f32.mrf.mxu0
        %v1980 = vadd.f32 %v1819, %v1979
        %v1981 = vpop.f32.mrf.mxu0
        %v1982 = vadd.f32 %v1821, %v1981
        %1983 = vmatprep.mubr.f32.mxu0 %v233
        %1984 = vmatmul.mubr.f32.gmra.mxu0 %v232
        %v1985 = vpop.f32.mrf.mxu0
        %v1986 = vadd.f32 %v1825, %v1985
        %v1987 = vpop.f32.mrf.mxu0
        %v1988 = vadd.f32 %v1827, %v1987
        %1989 = vmatprep.mubr.f32.mxu0 %v241
        %1990 = vmatmul.mubr.f32.gmra.mxu0 %v240
        %v1991 = vpop.f32.mrf.mxu0
        %v1992 = vadd.f32 %v1831, %v1991
        %v1993 = vpop.f32.mrf.mxu0
        %v1994 = vadd.f32 %v1833, %v1993
        %1995 = vmatprep.mubr.f32.mxu0 %v249
        %1996 = vmatmul.mubr.f32.gmra.mxu0 %v248
        %v1997 = vpop.f32.mrf.mxu0
        %v1998 = vadd.f32 %v1837, %v1997
        %v1999 = vpop.f32.mrf.mxu0
        %v2000 = vadd.f32 %v1839, %v1999
        %2001 = vmatprep.mubr.f32.mxu0 %v257
        %2002 = vmatmul.mubr.f32.gmra.mxu0 %v256
        %v2003 = vpop.f32.mrf.mxu0
        %v2004 = vadd.f32 %v1843, %v2003
        %v2005 = vpop.f32.mrf.mxu0
        %v2006 = vadd.f32 %v1845, %v2005
        %2007 = vmatprep.mubr.f32.mxu0 %v265
        %2008 = vmatmul.mubr.f32.gmra.mxu0 %v264
        %v2009 = vpop.f32.mrf.mxu0
        %v2010 = vadd.f32 %v1849, %v2009
        %v2011 = vpop.f32.mrf.mxu0
        %v2012 = vadd.f32 %v1851, %v2011
        %2013 = vmatprep.mubr.f32.mxu0 %v273
        %2014 = vmatmul.mubr.f32.gmra.mxu0 %v272
        %v2015 = vpop.f32.mrf.mxu0
        %v2016 = vadd.f32 %v1855, %v2015
        %v2017 = vpop.f32.mrf.mxu0
        %v2018 = vadd.f32 %v1857, %v2017
        %2019 = vmatprep.mubr.f32.mxu0 %v281
        %2020 = vmatmul.mubr.f32.gmra.mxu0 %v280
        %v2021 = vpop.f32.mrf.mxu0
        %v2022 = vadd.f32 %v1861, %v2021
        %v2023 = vpop.f32.mrf.mxu0
        %v2024 = vadd.f32 %v1863, %v2023
        %2025 = vmatprep.mubr.f32.mxu0 %v289
        %2026 = vmatmul.mubr.f32.gmra.mxu0 %v288
        %v2027 = vpop.f32.mrf.mxu0
        %v2028 = vadd.f32 %v1867, %v2027
        %v2029 = vpop.f32.mrf.mxu0
        %v2030 = vadd.f32 %v1869, %v2029
        %2031 = vmatprep.mubr.f32.mxu0 %v297
        %2032 = vmatmul.mubr.f32.gmra.mxu0 %v296
        %v2033 = vpop.f32.mrf.mxu0
        %v2034 = vadd.f32 %v1873, %v2033
        %v2035 = vpop.f32.mrf.mxu0
        %v2036 = vadd.f32 %v1875, %v2035
        %2037 = vmatprep.mubr.f32.mxu0 %v305
        %2038 = vmatmul.mubr.f32.gmra.mxu0 %v304
        %v2039 = vpop.f32.mrf.mxu0
        %v2040 = vadd.f32 %v1879, %v2039
        %v2041 = vpop.f32.mrf.mxu0
        %v2042 = vadd.f32 %v1881, %v2041
        %2043 = vdwg.mxu0
        %2044 = vmatprep.subr.mxu0 %v885
        %2045 = vmatpush1.msra.mxu0 %v884
        %2046 = vmatprep.subr.mxu0 %v881
        %2047 = vmatpush1.msra.mxu0 %v880
        %2048 = vmatprep.subr.mxu0 %v877
        %2049 = vmatpush1.msra.mxu0 %v876
        %2050 = vmatprep.subr.mxu0 %v873
        %2051 = vmatpush1.msra.mxu0 %v872
        %2052 = vmatprep.subr.mxu0 %v869
        %2053 = vmatpush1.msra.mxu0 %v868
        %2054 = vmatprep.subr.mxu0 %v865
        %2055 = vmatpush1.msra.mxu0 %v864
        %2056 = vmatprep.subr.mxu0 %v861
        %2057 = vmatpush1.msra.mxu0 %v860
        %2058 = vmatprep.subr.mxu0 %v857
        %2059 = vmatpush1.msra.mxu0 %v856
        %2060 = vmatprep.subr.mxu0 %v853
        %2061 = vmatpush1.msra.mxu0 %v852
        %2062 = vmatprep.subr.mxu0 %v849
        %2063 = vmatpush1.msra.mxu0 %v848
        %2064 = vmatprep.subr.mxu0 %v845
        %2065 = vmatpush1.msra.mxu0 %v844
        %2066 = vmatprep.subr.mxu0 %v841
        %2067 = vmatpush1.msra.mxu0 %v840
        %2068 = vmatprep.subr.mxu0 %v837
        %2069 = vmatpush1.msra.mxu0 %v836
        %2070 = vmatprep.subr.mxu0 %v833
        %2071 = vmatpush1.msra.mxu0 %v832
        %2072 = vmatprep.subr.mxu0 %v829
        %2073 = vmatpush1.msra.mxu0 %v828
        %2074 = vmatprep.subr.mxu0 %v825
        %2075 = vmatpush1.msra.mxu0 %v824
        %2076 = vmatprep.subr.mxu0 %v949
        %2077 = vmatpush2.msra.mxu0 %v948
        %2078 = vmatprep.subr.mxu0 %v945
        %2079 = vmatpush2.msra.mxu0 %v944
        %2080 = vmatprep.subr.mxu0 %v941
        %2081 = vmatpush2.msra.mxu0 %v940
        %2082 = vmatprep.subr.mxu0 %v937
        %2083 = vmatpush2.msra.mxu0 %v936
        %2084 = vmatprep.subr.mxu0 %v933
        %2085 = vmatpush2.msra.mxu0 %v932
        %2086 = vmatprep.subr.mxu0 %v929
        %2087 = vmatpush2.msra.mxu0 %v928
        %2088 = vmatprep.subr.mxu0 %v925
        %2089 = vmatpush2.msra.mxu0 %v924
        %2090 = vmatprep.subr.mxu0 %v921
        %2091 = vmatpush2.msra.mxu0 %v920
        %2092 = vmatprep.subr.mxu0 %v917
        %2093 = vmatpush2.msra.mxu0 %v916
        %2094 = vmatprep.subr.mxu0 %v913
        %2095 = vmatpush2.msra.mxu0 %v912
        %2096 = vmatprep.subr.mxu0 %v909
        %2097 = vmatpush2.msra.mxu0 %v908
        %2098 = vmatprep.subr.mxu0 %v905
        %2099 = vmatpush2.msra.mxu0 %v904
        %2100 = vmatprep.subr.mxu0 %v901
        %2101 = vmatpush2.msra.mxu0 %v900
        %2102 = vmatprep.subr.mxu0 %v897
        %2103 = vmatpush2.msra.mxu0 %v896
        %2104 = vmatprep.subr.mxu0 %v893
        %2105 = vmatpush2.msra.mxu0 %v892
        %2106 = vmatprep.subr.mxu0 %v889
        %2107 = vmatpush2.msra.mxu0 %v888
        %2108 = vmatprep.mubr.f32.mxu0 %v187
        %2109 = vmatmul.mubr.f32.gmra.mxu0 %v186
        %v2110 = vpop.f32.mrf.mxu0
        %v2111 = vadd.f32 %v1950, %v2110
        %v2112 = vpop.f32.mrf.mxu0
        %v2113 = vadd.f32 %v1952, %v2112
        %2114 = vmatprep.mubr.f32.mxu0 %v195
        %2115 = vmatmul.mubr.f32.gmra.mxu0 %v194
        %v2116 = vpop.f32.mrf.mxu0
        %v2117 = vadd.f32 %v1956, %v2116
        %v2118 = vpop.f32.mrf.mxu0
        %v2119 = vadd.f32 %v1958, %v2118
        %2120 = vmatprep.mubr.f32.mxu0 %v203
        %2121 = vmatmul.mubr.f32.gmra.mxu0 %v202
        %v2122 = vpop.f32.mrf.mxu0
        %v2123 = vadd.f32 %v1962, %v2122
        %v2124 = vpop.f32.mrf.mxu0
        %v2125 = vadd.f32 %v1964, %v2124
        %2126 = vmatprep.mubr.f32.mxu0 %v211
        %2127 = vmatmul.mubr.f32.gmra.mxu0 %v210
        %v2128 = vpop.f32.mrf.mxu0
        %v2129 = vadd.f32 %v1968, %v2128
        %v2130 = vpop.f32.mrf.mxu0
        %v2131 = vadd.f32 %v1970, %v2130
        %2132 = vmatprep.mubr.f32.mxu0 %v219
        %2133 = vmatmul.mubr.f32.gmra.mxu0 %v218
        %v2134 = vpop.f32.mrf.mxu0
        %v2135 = vadd.f32 %v1974, %v2134
        %v2136 = vpop.f32.mrf.mxu0
        %v2137 = vadd.f32 %v1976, %v2136
        %2138 = vmatprep.mubr.f32.mxu0 %v227
        %2139 = vmatmul.mubr.f32.gmra.mxu0 %v226
        %v2140 = vpop.f32.mrf.mxu0
        %v2141 = vadd.f32 %v1980, %v2140
        %v2142 = vpop.f32.mrf.mxu0
        %v2143 = vadd.f32 %v1982, %v2142
        %2144 = vmatprep.mubr.f32.mxu0 %v235
        %2145 = vmatmul.mubr.f32.gmra.mxu0 %v234
        %v2146 = vpop.f32.mrf.mxu0
        %v2147 = vadd.f32 %v1986, %v2146
        %v2148 = vpop.f32.mrf.mxu0
        %v2149 = vadd.f32 %v1988, %v2148
        %2150 = vmatprep.mubr.f32.mxu0 %v243
        %2151 = vmatmul.mubr.f32.gmra.mxu0 %v242
        %v2152 = vpop.f32.mrf.mxu0
        %v2153 = vadd.f32 %v1992, %v2152
        %v2154 = vpop.f32.mrf.mxu0
        %v2155 = vadd.f32 %v1994, %v2154
        %2156 = vmatprep.mubr.f32.mxu0 %v251
        %2157 = vmatmul.mubr.f32.gmra.mxu0 %v250
        %v2158 = vpop.f32.mrf.mxu0
        %v2159 = vadd.f32 %v1998, %v2158
        %v2160 = vpop.f32.mrf.mxu0
        %v2161 = vadd.f32 %v2000, %v2160
        %2162 = vmatprep.mubr.f32.mxu0 %v259
        %2163 = vmatmul.mubr.f32.gmra.mxu0 %v258
        %v2164 = vpop.f32.mrf.mxu0
        %v2165 = vadd.f32 %v2004, %v2164
        %v2166 = vpop.f32.mrf.mxu0
        %v2167 = vadd.f32 %v2006, %v2166
        %2168 = vmatprep.mubr.f32.mxu0 %v267
        %2169 = vmatmul.mubr.f32.gmra.mxu0 %v266
        %v2170 = vpop.f32.mrf.mxu0
        %v2171 = vadd.f32 %v2010, %v2170
        %v2172 = vpop.f32.mrf.mxu0
        %v2173 = vadd.f32 %v2012, %v2172
        %2174 = vmatprep.mubr.f32.mxu0 %v275
        %2175 = vmatmul.mubr.f32.gmra.mxu0 %v274
        %v2176 = vpop.f32.mrf.mxu0
        %v2177 = vadd.f32 %v2016, %v2176
        %v2178 = vpop.f32.mrf.mxu0
        %v2179 = vadd.f32 %v2018, %v2178
        %2180 = vmatprep.mubr.f32.mxu0 %v283
        %2181 = vmatmul.mubr.f32.gmra.mxu0 %v282
        %v2182 = vpop.f32.mrf.mxu0
        %v2183 = vadd.f32 %v2022, %v2182
        %v2184 = vpop.f32.mrf.mxu0
        %v2185 = vadd.f32 %v2024, %v2184
        %2186 = vmatprep.mubr.f32.mxu0 %v291
        %2187 = vmatmul.mubr.f32.gmra.mxu0 %v290
        %v2188 = vpop.f32.mrf.mxu0
        %v2189 = vadd.f32 %v2028, %v2188
        %v2190 = vpop.f32.mrf.mxu0
        %v2191 = vadd.f32 %v2030, %v2190
        %2192 = vmatprep.mubr.f32.mxu0 %v299
        %2193 = vmatmul.mubr.f32.gmra.mxu0 %v298
        %v2194 = vpop.f32.mrf.mxu0
        %v2195 = vadd.f32 %v2034, %v2194
        %v2196 = vpop.f32.mrf.mxu0
        %v2197 = vadd.f32 %v2036, %v2196
        %2198 = vmatprep.mubr.f32.mxu0 %v307
        %2199 = vmatmul.mubr.f32.gmra.mxu0 %v306
        %v2200 = vpop.f32.mrf.mxu0
        %v2201 = vadd.f32 %v2040, %v2200
        %v2202 = vpop.f32.mrf.mxu0
        %v2203 = vadd.f32 %v2042, %v2202
        %2204 = vdwg.mxu0
        %2205 = vmatprep.subr.mxu0 %v1013
        %2206 = vmatpush1.msra.mxu0 %v1012
        %2207 = vmatprep.subr.mxu0 %v1009
        %2208 = vmatpush1.msra.mxu0 %v1008
        %2209 = vmatprep.subr.mxu0 %v1005
        %2210 = vmatpush1.msra.mxu0 %v1004
        %2211 = vmatprep.subr.mxu0 %v1001
        %2212 = vmatpush1.msra.mxu0 %v1000
        %2213 = vmatprep.subr.mxu0 %v997
        %2214 = vmatpush1.msra.mxu0 %v996
        %2215 = vmatprep.subr.mxu0 %v993
        %2216 = vmatpush1.msra.mxu0 %v992
        %2217 = vmatprep.subr.mxu0 %v989
        %2218 = vmatpush1.msra.mxu0 %v988
        %2219 = vmatprep.subr.mxu0 %v985
        %2220 = vmatpush1.msra.mxu0 %v984
        %2221 = vmatprep.subr.mxu0 %v981
        %2222 = vmatpush1.msra.mxu0 %v980
        %2223 = vmatprep.subr.mxu0 %v977
        %2224 = vmatpush1.msra.mxu0 %v976
        %2225 = vmatprep.subr.mxu0 %v973
        %2226 = vmatpush1.msra.mxu0 %v972
        %2227 = vmatprep.subr.mxu0 %v969
        %2228 = vmatpush1.msra.mxu0 %v968
        %2229 = vmatprep.subr.mxu0 %v965
        %2230 = vmatpush1.msra.mxu0 %v964
        %2231 = vmatprep.subr.mxu0 %v961
        %2232 = vmatpush1.msra.mxu0 %v960
        %2233 = vmatprep.subr.mxu0 %v957
        %2234 = vmatpush1.msra.mxu0 %v956
        %2235 = vmatprep.subr.mxu0 %v953
        %2236 = vmatpush1.msra.mxu0 %v952
        %2237 = vmatprep.subr.mxu0 %v1077
        %2238 = vmatpush2.msra.mxu0 %v1076
        %2239 = vmatprep.subr.mxu0 %v1073
        %2240 = vmatpush2.msra.mxu0 %v1072
        %2241 = vmatprep.subr.mxu0 %v1069
        %2242 = vmatpush2.msra.mxu0 %v1068
        %2243 = vmatprep.subr.mxu0 %v1065
        %2244 = vmatpush2.msra.mxu0 %v1064
        %2245 = vmatprep.subr.mxu0 %v1061
        %2246 = vmatpush2.msra.mxu0 %v1060
        %2247 = vmatprep.subr.mxu0 %v1057
        %2248 = vmatpush2.msra.mxu0 %v1056
        %2249 = vmatprep.subr.mxu0 %v1053
        %2250 = vmatpush2.msra.mxu0 %v1052
        %2251 = vmatprep.subr.mxu0 %v1049
        %2252 = vmatpush2.msra.mxu0 %v1048
        %2253 = vmatprep.subr.mxu0 %v1045
        %2254 = vmatpush2.msra.mxu0 %v1044
        %2255 = vmatprep.subr.mxu0 %v1041
        %2256 = vmatpush2.msra.mxu0 %v1040
        %2257 = vmatprep.subr.mxu0 %v1037
        %2258 = vmatpush2.msra.mxu0 %v1036
        %2259 = vmatprep.subr.mxu0 %v1033
        %2260 = vmatpush2.msra.mxu0 %v1032
        %2261 = vmatprep.subr.mxu0 %v1029
        %2262 = vmatpush2.msra.mxu0 %v1028
        %2263 = vmatprep.subr.mxu0 %v1025
        %2264 = vmatpush2.msra.mxu0 %v1024
        %2265 = vmatprep.subr.mxu0 %v1021
        %2266 = vmatpush2.msra.mxu0 %v1020
        %2267 = vmatprep.subr.mxu0 %v1017
        %2268 = vmatpush2.msra.mxu0 %v1016
        %2269 = vmatprep.mubr.f32.mxu0 %v189
        %2270 = vmatmul.mubr.f32.gmra.mxu0 %v188
        %v2271 = vpop.f32.mrf.mxu0
        %v2272 = vadd.f32 %v2111, %v2271
        %v2273 = vpop.f32.mrf.mxu0
        %v2274 = vadd.f32 %v2113, %v2273
        %2275 = vmatprep.mubr.f32.mxu0 %v197
        %2276 = vmatmul.mubr.f32.gmra.mxu0 %v196
        %v2277 = vpop.f32.mrf.mxu0
        %v2278 = vadd.f32 %v2117, %v2277
        %v2279 = vpop.f32.mrf.mxu0
        %v2280 = vadd.f32 %v2119, %v2279
        %2281 = vmatprep.mubr.f32.mxu0 %v205
        %2282 = vmatmul.mubr.f32.gmra.mxu0 %v204
        %v2283 = vpop.f32.mrf.mxu0
        %v2284 = vadd.f32 %v2123, %v2283
        %v2285 = vpop.f32.mrf.mxu0
        %v2286 = vadd.f32 %v2125, %v2285
        %2287 = vmatprep.mubr.f32.mxu0 %v213
        %2288 = vmatmul.mubr.f32.gmra.mxu0 %v212
        %v2289 = vpop.f32.mrf.mxu0
        %v2290 = vadd.f32 %v2129, %v2289
        %v2291 = vpop.f32.mrf.mxu0
        %v2292 = vadd.f32 %v2131, %v2291
        %2293 = vmatprep.mubr.f32.mxu0 %v221
        %2294 = vmatmul.mubr.f32.gmra.mxu0 %v220
        %v2295 = vpop.f32.mrf.mxu0
        %v2296 = vadd.f32 %v2135, %v2295
        %v2297 = vpop.f32.mrf.mxu0
        %v2298 = vadd.f32 %v2137, %v2297
        %2299 = vmatprep.mubr.f32.mxu0 %v229
        %2300 = vmatmul.mubr.f32.gmra.mxu0 %v228
        %v2301 = vpop.f32.mrf.mxu0
        %v2302 = vadd.f32 %v2141, %v2301
        %v2303 = vpop.f32.mrf.mxu0
        %v2304 = vadd.f32 %v2143, %v2303
        %2305 = vmatprep.mubr.f32.mxu0 %v237
        %2306 = vmatmul.mubr.f32.gmra.mxu0 %v236
        %v2307 = vpop.f32.mrf.mxu0
        %v2308 = vadd.f32 %v2147, %v2307
        %v2309 = vpop.f32.mrf.mxu0
        %v2310 = vadd.f32 %v2149, %v2309
        %2311 = vmatprep.mubr.f32.mxu0 %v245
        %2312 = vmatmul.mubr.f32.gmra.mxu0 %v244
        %v2313 = vpop.f32.mrf.mxu0
        %v2314 = vadd.f32 %v2153, %v2313
        %v2315 = vpop.f32.mrf.mxu0
        %v2316 = vadd.f32 %v2155, %v2315
        %2317 = vmatprep.mubr.f32.mxu0 %v253
        %2318 = vmatmul.mubr.f32.gmra.mxu0 %v252
        %v2319 = vpop.f32.mrf.mxu0
        %v2320 = vadd.f32 %v2159, %v2319
        %v2321 = vpop.f32.mrf.mxu0
        %v2322 = vadd.f32 %v2161, %v2321
        %2323 = vmatprep.mubr.f32.mxu0 %v261
        %2324 = vmatmul.mubr.f32.gmra.mxu0 %v260
        %v2325 = vpop.f32.mrf.mxu0
        %v2326 = vadd.f32 %v2165, %v2325
        %v2327 = vpop.f32.mrf.mxu0
        %v2328 = vadd.f32 %v2167, %v2327
        %2329 = vmatprep.mubr.f32.mxu0 %v269
        %2330 = vmatmul.mubr.f32.gmra.mxu0 %v268
        %v2331 = vpop.f32.mrf.mxu0
        %v2332 = vadd.f32 %v2171, %v2331
        %v2333 = vpop.f32.mrf.mxu0
        %v2334 = vadd.f32 %v2173, %v2333
        %2335 = vmatprep.mubr.f32.mxu0 %v277
        %2336 = vmatmul.mubr.f32.gmra.mxu0 %v276
        %v2337 = vpop.f32.mrf.mxu0
        %v2338 = vadd.f32 %v2177, %v2337
        %v2339 = vpop.f32.mrf.mxu0
        %v2340 = vadd.f32 %v2179, %v2339
        %2341 = vmatprep.mubr.f32.mxu0 %v285
        %2342 = vmatmul.mubr.f32.gmra.mxu0 %v284
        %v2343 = vpop.f32.mrf.mxu0
        %v2344 = vadd.f32 %v2183, %v2343
        %v2345 = vpop.f32.mrf.mxu0
        %v2346 = vadd.f32 %v2185, %v2345
        %2347 = vmatprep.mubr.f32.mxu0 %v293
        %2348 = vmatmul.mubr.f32.gmra.mxu0 %v292
        %v2349 = vpop.f32.mrf.mxu0
        %v2350 = vadd.f32 %v2189, %v2349
        %v2351 = vpop.f32.mrf.mxu0
        %v2352 = vadd.f32 %v2191, %v2351
        %2353 = vmatprep.mubr.f32.mxu0 %v301
        %2354 = vmatmul.mubr.f32.gmra.mxu0 %v300
        %v2355 = vpop.f32.mrf.mxu0
        %v2356 = vadd.f32 %v2195, %v2355
        %v2357 = vpop.f32.mrf.mxu0
        %v2358 = vadd.f32 %v2197, %v2357
        %2359 = vmatprep.mubr.f32.mxu0 %v309
        %2360 = vmatmul.mubr.f32.gmra.mxu0 %v308
        %v2361 = vpop.f32.mrf.mxu0
        %v2362 = vadd.f32 %v2201, %v2361
        %v2363 = vpop.f32.mrf.mxu0
        %v2364 = vadd.f32 %v2203, %v2363
        %2365 = vdwg.mxu0
        %vm2366 = vcmp.lt.f32.partialorder %v1628, 0.0
        %vm2367 = vcmp.lt.f32.partialorder %v1630, 0.0
        %vm2368 = vcmp.lt.f32.partialorder %v2272, 0.0
        %vm2369 = vcmp.lt.f32.partialorder %v2274, 0.0
        %vm2370 = vcmp.lt.f32.partialorder %v1634, 0.0
        %vm2371 = vcmp.lt.f32.partialorder %v1636, 0.0
        %vm2372 = vcmp.lt.f32.partialorder %v2278, 0.0
        %vm2373 = vcmp.lt.f32.partialorder %v2280, 0.0
        %vm2374 = vcmp.lt.f32.partialorder %v1640, 0.0
        %vm2375 = vcmp.lt.f32.partialorder %v1642, 0.0
        %vm2376 = vcmp.lt.f32.partialorder %v2284, 0.0
        %vm2377 = vcmp.lt.f32.partialorder %v2286, 0.0
        %vm2378 = vcmp.lt.f32.partialorder %v1646, 0.0
        %vm2379 = vcmp.lt.f32.partialorder %v1648, 0.0
        %vm2380 = vcmp.lt.f32.partialorder %v2290, 0.0
        %vm2381 = vcmp.lt.f32.partialorder %v2292, 0.0
        %vm2382 = vcmp.lt.f32.partialorder %v1652, 0.0
        %vm2383 = vcmp.lt.f32.partialorder %v1654, 0.0
        %vm2384 = vcmp.lt.f32.partialorder %v2296, 0.0
        %vm2385 = vcmp.lt.f32.partialorder %v2298, 0.0
        %vm2386 = vcmp.lt.f32.partialorder %v1658, 0.0
        %vm2387 = vcmp.lt.f32.partialorder %v1660, 0.0
        %vm2388 = vcmp.lt.f32.partialorder %v2302, 0.0
        %vm2389 = vcmp.lt.f32.partialorder %v2304, 0.0
        %vm2390 = vcmp.lt.f32.partialorder %v1664, 0.0
        %vm2391 = vcmp.lt.f32.partialorder %v1666, 0.0
        %vm2392 = vcmp.lt.f32.partialorder %v2308, 0.0
        %vm2393 = vcmp.lt.f32.partialorder %v2310, 0.0
        %vm2394 = vcmp.lt.f32.partialorder %v1670, 0.0
        %vm2395 = vcmp.lt.f32.partialorder %v1672, 0.0
        %vm2396 = vcmp.lt.f32.partialorder %v2314, 0.0
        %vm2397 = vcmp.lt.f32.partialorder %v2316, 0.0
        %vm2398 = vcmp.lt.f32.partialorder %v1676, 0.0
        %vm2399 = vcmp.lt.f32.partialorder %v1678, 0.0
        %vm2400 = vcmp.lt.f32.partialorder %v2320, 0.0
        %vm2401 = vcmp.lt.f32.partialorder %v2322, 0.0
        %vm2402 = vcmp.lt.f32.partialorder %v1682, 0.0
        %vm2403 = vcmp.lt.f32.partialorder %v1684, 0.0
        %vm2404 = vcmp.lt.f32.partialorder %v2326, 0.0
        %vm2405 = vcmp.lt.f32.partialorder %v2328, 0.0
        %vm2406 = vcmp.lt.f32.partialorder %v1688, 0.0
        %vm2407 = vcmp.lt.f32.partialorder %v1690, 0.0
        %vm2408 = vcmp.lt.f32.partialorder %v2332, 0.0
        %vm2409 = vcmp.lt.f32.partialorder %v2334, 0.0
        %vm2410 = vcmp.lt.f32.partialorder %v1694, 0.0
        %vm2411 = vcmp.lt.f32.partialorder %v1696, 0.0
        %vm2412 = vcmp.lt.f32.partialorder %v2338, 0.0
        %vm2413 = vcmp.lt.f32.partialorder %v2340, 0.0
        %vm2414 = vcmp.lt.f32.partialorder %v1700, 0.0
        %vm2415 = vcmp.lt.f32.partialorder %v1702, 0.0
        %vm2416 = vcmp.lt.f32.partialorder %v2344, 0.0
        %vm2417 = vcmp.lt.f32.partialorder %v2346, 0.0
        %vm2418 = vcmp.lt.f32.partialorder %v1706, 0.0
        %vm2419 = vcmp.lt.f32.partialorder %v1708, 0.0
        %vm2420 = vcmp.lt.f32.partialorder %v2350, 0.0
        %vm2421 = vcmp.lt.f32.partialorder %v2352, 0.0
        %vm2422 = vcmp.lt.f32.partialorder %v1712, 0.0
        %vm2423 = vcmp.lt.f32.partialorder %v1714, 0.0
        %vm2424 = vcmp.lt.f32.partialorder %v2356, 0.0
        %vm2425 = vcmp.lt.f32.partialorder %v2358, 0.0
        %vm2426 = vcmp.lt.f32.partialorder %v1718, 0.0
        %vm2427 = vcmp.lt.f32.partialorder %v1720, 0.0
        %vm2428 = vcmp.lt.f32.partialorder %v2362, 0.0
        %vm2429 = vcmp.lt.f32.partialorder %v2364, 0.0
        %vm2430 = vmpackc.low %vm2370, %vm2366
        %vm2431 = vmpackc.low %vm2378, %vm2374
        %vm2432 = vmpackc.even %vm2431, %vm2430
        %vm2433 = vmpackc.low %vm2371, %vm2367
        %vm2434 = vmpackc.low %vm2379, %vm2375
        %vm2435 = vmpackc.even %vm2434, %vm2433
        %vm2436 = vmpackc.low %vm2372, %vm2368
        %vm2437 = vmpackc.low %vm2380, %vm2376
        %vm2438 = vmpackc.even %vm2437, %vm2436
        %vm2439 = vmpackc.low %vm2373, %vm2369
        %vm2440 = vmpackc.low %vm2381, %vm2377
        %vm2441 = vmpackc.even %vm2440, %vm2439
        %vm2442 = vmpackc.low %vm2386, %vm2382
        %vm2443 = vmpackc.low %vm2394, %vm2390
        %vm2444 = vmpackc.even %vm2443, %vm2442
        %vm2445 = vmpackc.low %vm2387, %vm2383
        %vm2446 = vmpackc.low %vm2395, %vm2391
        %vm2447 = vmpackc.even %vm2446, %vm2445
        %vm2448 = vmpackc.low %vm2388, %vm2384
        %vm2449 = vmpackc.low %vm2396, %vm2392
        %vm2450 = vmpackc.even %vm2449, %vm2448
        %vm2451 = vmpackc.low %vm2389, %vm2385
        %vm2452 = vmpackc.low %vm2397, %vm2393
        %vm2453 = vmpackc.even %vm2452, %vm2451
        %vm2454 = vmpackc.low %vm2402, %vm2398
        %vm2455 = vmpackc.low %vm2410, %vm2406
        %vm2456 = vmpackc.even %vm2455, %vm2454
        %vm2457 = vmpackc.low %vm2403, %vm2399
        %vm2458 = vmpackc.low %vm2411, %vm2407
        %vm2459 = vmpackc.even %vm2458, %vm2457
        %vm2460 = vmpackc.low %vm2404, %vm2400
        %vm2461 = vmpackc.low %vm2412, %vm2408
        %vm2462 = vmpackc.even %vm2461, %vm2460
        %vm2463 = vmpackc.low %vm2405, %vm2401
        %vm2464 = vmpackc.low %vm2413, %vm2409
        %vm2465 = vmpackc.even %vm2464, %vm2463
        %vm2466 = vmpackc.low %vm2418, %vm2414
        %vm2467 = vmpackc.low %vm2426, %vm2422
        %vm2468 = vmpackc.even %vm2467, %vm2466
        %vm2469 = vmpackc.low %vm2419, %vm2415
        %vm2470 = vmpackc.low %vm2427, %vm2423
        %vm2471 = vmpackc.even %vm2470, %vm2469
        %vm2472 = vmpackc.low %vm2420, %vm2416
        %vm2473 = vmpackc.low %vm2428, %vm2424
        %vm2474 = vmpackc.even %vm2473, %vm2472
        %vm2475 = vmpackc.low %vm2421, %vm2417
        %vm2476 = vmpackc.low %vm2429, %vm2425
        %vm2477 = vmpackc.even %vm2476, %vm2475
        %v2478 = vsel %vm2432, 16843009, 0
        %v2479 = vsel %vm2435, 16843009, 0
        %v2480 = vsel %vm2438, 16843009, 0
        %v2481 = vsel %vm2441, 16843009, 0
        %v2482 = vsel %vm2444, 16843009, 0
        %v2483 = vsel %vm2447, 16843009, 0
        %v2484 = vsel %vm2450, 16843009, 0
        %v2485 = vsel %vm2453, 16843009, 0
        %v2486 = vsel %vm2456, 16843009, 0
        %v2487 = vsel %vm2459, 16843009, 0
        %v2488 = vsel %vm2462, 16843009, 0
        %v2489 = vsel %vm2465, 16843009, 0
        %v2490 = vsel %vm2468, 16843009, 0
        %v2491 = vsel %vm2471, 16843009, 0
        %v2492 = vsel %vm2474, 16843009, 0
        %v2493 = vsel %vm2477, 16843009, 0
        %2494 = vst [vmem:[%s177] sm:$0xff] %v2478
        %2495 = vst [vmem:[%s177 + $0x8] sm:$0xff] %v2479
        %2496 = vst [vmem:[%s177 + $0x10] sm:$0xff] %v2480
        %2497 = vst [vmem:[%s177 + $0x18] sm:$0xff] %v2481
        %2498 = vst [vmem:[%s177 + $0x20] sm:$0xff] %v2482
        %2499 = vst [vmem:[%s177 + $0x28] sm:$0xff] %v2483
        %2500 = vst [vmem:[%s177 + $0x30] sm:$0xff] %v2484
        %2501 = vst [vmem:[%s177 + $0x38] sm:$0xff] %v2485
        %2502 = vst [vmem:[%s177 + $0x40] sm:$0xff] %v2486
        %2503 = vst [vmem:[%s177 + $0x48] sm:$0xff] %v2487
        %2504 = vst [vmem:[%s177 + $0x50] sm:$0xff] %v2488
        %2505 = vst [vmem:[%s177 + $0x58] sm:$0xff] %v2489
        %2506 = vst [vmem:[%s177 + $0x60] sm:$0xff] %v2490
        %2507 = vst [vmem:[%s177 + $0x68] sm:$0xff] %v2491
        %2508 = vst [vmem:[%s177 + $0x70] sm:$0xff] %v2492
        %2509 = vst [vmem:[%s177 + $0x78] sm:$0xff] %v2493
        %s2510 = sand.u32 %s75, 1
        %s2511 = scalar_lea.sflag [#allocation4], %s2510
        %s2512 = sand.u32 %s75, 1
        %s2513 = smul.addr %s2512, 128
        %s2514 = scalar_lea.vmem [#allocation7], %s2513
        // Predicated region
        $region37: #{tpu_custom_call.1} parent=27 // pred_check
          %p2515 = pneg %p85
        $region38: #{tpu_custom_call.1} parent=27 // pred_check_branch
          %2517 = sbr.rel (%p2515) target = $region40
        $region39: #{tpu_custom_call.1} parent=27 // pred_region
          %s2518 = smul.u32 4, %s20
          %s2520 = ssub.s32 2048, 2048
          %2521 = vsyncadd %s2511, %s2520
          %s2522 = smul.addr %s2518, 4
          %s2523 = smul.addr %s2522, 128
          %s2524 = scalar_lea.hbm %s2, %s2523
          %s2525 = sshll.u32 %s2514, 4
          %s2526 = int_to_ptr.vmem [resolvable:$true] %s2525
          %2531 = dma.vmem_to_hbm [thread:$0]  %s2526, 2048, %s2524, %s2511, 512, 512, 32
        $region40: #{tpu_custom_call.1} parent=27 // pred_fallthru
          _
      $region28: #{tpu_custom_call.1} parent=5 // pred_fallthru
        _
      %p2532 = scmp.le.s32.totalorder 2, %s15
      // Predicated region
      $region41: #{tpu_custom_call.1} parent=5 // pred_check
        %p2533 = pneg %p2532
      $region42: #{tpu_custom_call.1} parent=5 // pred_check_branch
        %2535 = sbr.rel (%p2533) target = $region44
      $region43: #{tpu_custom_call.1} parent=5 // pred_region
        %s2536 = ssub.s32 %s15, 2
        // Predicated region
        $region45: #{tpu_custom_call.1} parent=43 // pred_check
          %p2537 = pneg %p91
        $region46: #{tpu_custom_call.1} parent=43 // pred_check_branch
          %2539 = sbr.rel (%p2537) target = $region48
        $region47: #{tpu_custom_call.1} parent=43 // pred_region
          %s2540 = sand.u32 %s76, 1
          %s2541 = scalar_lea.sflag [#allocation4], %s2540
          %s2542 = sand.u32 %s76, 1
          %s2543 = smul.addr %s2542, 128
          %s2544 = scalar_lea.vmem [#allocation7], %s2543
          %2545 = dma.done %s2541, 2048
        $region48: #{tpu_custom_call.1} parent=43 // pred_fallthru
          _
      $region44: #{tpu_custom_call.1} parent=5 // pred_fallthru
        _
    $region6: #{tpu_custom_call.1} parent=1 // loop_footer
      %s19 = sadd.s32 1, %s15
    $region7: #{tpu_custom_call.1} parent=1 // loop_footer_branch
      %14 = sbr.rel target = $region3
    $region8: #{tpu_custom_call.1} parent=1 // loop_exit
      _
    %2546 = vsyncpa [#allocation3], 1
    %s2547 = scalar_lea.sflag [#allocation3], 1
    %2548 = vsyncpa %s2547, 1
    %2549 = vsyncpa [#allocation6], 1
    %2550 = vsyncpa [#allocation4], 1
    %s2551 = scalar_lea.sflag [#allocation4], 1
    %2552 = vsyncpa %s2551, 1

</llo_original>
